<compile_context>
chip_gen: v5e
topology: v5e:2x2
jax: 0.10.0
libtpu: 0.0.40
codegen_flags: <defaults>
</compile_context>

<pallas_src>
import jax
import jax.numpy as jnp
from jax.experimental import pallas as pl
from jax.experimental.pallas import tpu as pltpu


def _generator_kernel(x_ref, w1_ref, b1_ref, w2_ref, b2_ref, o_ref):
    # x_ref:  [bm, D_in]   bf16 tile of the batch
    # w1_ref: [D_in, H]    bf16 (first Linear weight, transposed to [in, out])
    # b1_ref: [1, H]       f32
    # w2_ref: [H, D_out]   bf16 (second Linear weight, transposed to [in, out])
    # b2_ref: [1, D_out]   f32
    # o_ref:  [bm, D_out]  f32 output tile

    # Linear 1: bf16 MXU matmul, f32 accumulate, f32 bias add.
    h = jnp.dot(x_ref[...], w1_ref[...], preferred_element_type=jnp.float32)
    h = h + b1_ref[...]

    # LeakyReLU(0.2) in f32 on the VPU: max(h, 0.2*h) since 0.2 > 0.
    h = jnp.maximum(h, 0.2 * h)

    # Dropout(0.1): identity in eval mode.

    # Linear 2: cast activations back to bf16 for the MXU, accumulate in f32.
    out = jnp.dot(h.astype(w2_ref.dtype), w2_ref[...],
                  preferred_element_type=jnp.float32)
    out = out + b2_ref[...]
    o_ref[...] = out.astype(o_ref.dtype)


def _pad_axis(a, axis, multiple):
    size = a.shape[axis]
    pad = (-size) % multiple
    if pad == 0:
        return a
    widths = [(0, 0)] * a.ndim
    widths[axis] = (0, pad)
    return jnp.pad(a, widths)


def _pick_block_m(batch, target=256):
    """Batch tile: ~one full MXU height, and >=2 grid steps so v7x's 2 TCs both work."""
    if batch <= 8:
        return 8
    if batch >= 2 * target:
        return target
    half = -(-batch // 2)          # ceil(batch / 2) -> 2-step grid
    return -(-half // 8) * 8       # round up to sublane multiple


def generator_forward(noise, params, *, block_m=None, compute_dtype=jnp.bfloat16):
    """noise: [B, noise_size] float32.  params: dict with PyTorch-convention weights."""
    w1, b1, w2, b2 = params["w1"], params["b1"], params["w2"], params["b2"]
    B, d_in = noise.shape
    h_dim = w1.shape[0]            # w1: [hidden, noise]  (PyTorch nn.Linear convention)
    d_out = w2.shape[0]            # w2: [output, hidden]
    del h_dim

    if block_m is None:
        block_m = _pick_block_m(B)

    # Glue in plain JAX: transpose to [in, out], pad feature dims to 128 (lane-dense),
    # pad batch to a multiple of block_m, cast matmul operands to bf16.
    w1_t = _pad_axis(_pad_axis(w1.T, 0, 128), 1, 128).astype(compute_dtype)   # [d_in_p, h_p]
    w2_t = _pad_axis(_pad_axis(w2.T, 0, 128), 1, 128).astype(compute_dtype)   # [h_p, d_out_p]
    b1_r = _pad_axis(b1.reshape(1, -1).astype(jnp.float32), 1, 128)           # [1, h_p]
    b2_r = _pad_axis(b2.reshape(1, -1).astype(jnp.float32), 1, 128)           # [1, d_out_p]
    x = _pad_axis(_pad_axis(noise, 1, 128), 0, block_m).astype(compute_dtype)  # [Bp, d_in_p]

    Bp, d_in_p = x.shape
    h_p = w1_t.shape[1]
    d_out_p = w2_t.shape[1]
    grid = (Bp // block_m,)

    # Explicit VMEM budget (important on v7x: 64 MiB physical, 32 MiB scoped default).
    c_sz = jnp.dtype(compute_dtype).itemsize
    o_sz = jnp.dtype(noise.dtype).itemsize
    est = (2 * block_m * d_in_p * c_sz                       # x, double-buffered
           + 2 * block_m * d_out_p * o_sz                    # out, double-buffered
           + 2 * (d_in_p * h_p + h_p * d_out_p) * c_sz       # weights (worst case 2 bufs)
           + 2 * (h_p + d_out_p) * 4                         # biases
           + 2 * block_m * h_p * 4)                          # f32 intermediate + headroom
    vmem_limit = int(min(max(2 * est, 16 * 1024 * 1024), 96 * 1024 * 1024))

    def _call(single_buffer_weights):
        w_kwargs = {}
        if single_buffer_weights:
            # Grid-invariant operands: one buffer is enough; halves their VMEM footprint.
            w_kwargs = dict(pipeline_mode=pl.Buffered(1))
        in_specs = [
            pl.BlockSpec((block_m, d_in_p), lambda i: (i, 0)),            # x tile over batch
            pl.BlockSpec((d_in_p, h_p), lambda i: (0, 0), **w_kwargs),    # w1 (resident)
            pl.BlockSpec((1, h_p), lambda i: (0, 0), **w_kwargs),         # b1
            pl.BlockSpec((h_p, d_out_p), lambda i: (0, 0), **w_kwargs),   # w2 (resident)
            pl.BlockSpec((1, d_out_p), lambda i: (0, 0), **w_kwargs),     # b2
        ]
        return pl.pallas_call(
            _generator_kernel,
            out_shape=jax.ShapeDtypeStruct((Bp, d_out_p), noise.dtype),
            grid=grid,
            in_specs=in_specs,
            out_specs=pl.BlockSpec((block_m, d_out_p), lambda i: (i, 0)),
            compiler_params=pltpu.CompilerParams(
                dimension_semantics=("parallel",),
                vmem_limit_bytes=vmem_limit,
            ),
        )(x, w1_t, b1_r, w2_t, b2_r)

    try:
        out_p = _call(True)
    except Exception:
        # Fallback if single-buffering of invariant operands is rejected by this jax build.
        out_p = _call(False)

    # Strip batch / lane padding.
    return out_p[:B, :d_out]


def init_generator_params(key, noise_size, hidden_size, output_size, dtype=jnp.float32):
    """Deterministic synthetic init; shapes follow nn.Linear (weight: [out, in])."""
    k1, k2, k3, k4 = jax.random.split(key, 4)
    s1 = 1.0 / jnp.sqrt(noise_size)
    s2 = 1.0 / jnp.sqrt(hidden_size)
    return {
        "w1": jax.random.uniform(k1, (hidden_size, noise_size), dtype, -s1, s1),
        "b1": jax.random.uniform(k2, (hidden_size,), dtype, -s1, s1),
        "w2": jax.random.uniform(k3, (output_size, hidden_size), dtype, -s2, s2),
        "b2": jax.random.uniform(k4, (output_size,), dtype, -s2, s2),
    }


def _reference_forward(noise, params):
    # Pure-JAX f32 reference mirroring PyTorch eval-mode forward.
    h = noise @ params["w1"].T + params["b1"]
    h = jnp.where(h >= 0.0, h, 0.2 * h)          # LeakyReLU(0.2); dropout = identity (eval)
    return h @ params["w2"].T + params["b2"]


if __name__ == "__main__":
    # Small shapes consistent with the module (noise_size == hidden == output).
    B = 256
    NOISE = 256
    HIDDEN = 256
    OUTPUT = 256

    key = jax.random.PRNGKey(0)
    k_noise, k_params = jax.random.split(key)

    noise = jax.random.normal(k_noise, (B, NOISE), dtype=jnp.float32)
    params = init_generator_params(k_params, NOISE, HIDDEN, OUTPUT)

    out = generator_forward(noise, params)
    out = jax.block_until_ready(out)

    ref = _reference_forward(noise, params)
    assert out.shape == (B, OUTPUT), out.shape
    # bf16 matmul operands with f32 accumulation => modest tolerance vs the f32 reference.
    assert jnp.allclose(out, ref, atol=2e-2, rtol=2e-2), "mismatch vs reference"

    print("KERNEL_OK")
</pallas_src>

<mosaic_0001>
module attributes {stable_mosaic.version = 11 : i64} {
  func.func @_generator_kernel(%arg0: i32, %arg1: memref<128x256xbf16, #tpu.memory_space<vmem>>, %arg2: memref<256x256xbf16, #tpu.memory_space<vmem>>, %arg3: memref<1x256xf32, #tpu.memory_space<vmem>>, %arg4: memref<256x256xbf16, #tpu.memory_space<vmem>>, %arg5: memref<1x256xf32, #tpu.memory_space<vmem>>, %arg6: memref<128x256xf32, #tpu.memory_space<vmem>>) attributes {dimension_semantics = [#tpu.dimension_semantics<parallel>], iteration_bounds = array<i64: 2>, scalar_prefetch = 0 : i64, scratch_operands = 0 : i64, tpu.core_type = #tpu.core_type<tc>, window_params = [{transform_indices = @transform_0, window_bounds = array<i64: 128, 256>}, {pipeline_mode = #tpu.pipeline_mode<synchronous>, transform_indices = @transform_1, window_bounds = array<i64: 256, 256>}, {pipeline_mode = #tpu.pipeline_mode<synchronous>, transform_indices = @transform_2, window_bounds = array<i64: 1, 256>}, {pipeline_mode = #tpu.pipeline_mode<synchronous>, transform_indices = @transform_3, window_bounds = array<i64: 256, 256>}, {pipeline_mode = #tpu.pipeline_mode<synchronous>, transform_indices = @transform_4, window_bounds = array<i64: 1, 256>}, {transform_indices = @transform_5, window_bounds = array<i64: 128, 256>}]} {
    %c0 = arith.constant 0 : index
    %c0_0 = arith.constant 0 : index
    %0 = vector.load %arg1[%c0, %c0_0] : memref<128x256xbf16, #tpu.memory_space<vmem>>, vector<128x256xbf16>
    %c0_1 = arith.constant 0 : index
    %c0_2 = arith.constant 0 : index
    %1 = vector.load %arg2[%c0_1, %c0_2] : memref<256x256xbf16, #tpu.memory_space<vmem>>, vector<256x256xbf16>
    %cst = arith.constant dense<0.000000e+00> : vector<128x256xf32>
    %2 = tpu.matmul %0, %1, %cst {dimension_numbers = #tpu.dot_dimension_numbers<[1], [0], [0], [1], [0, 0, 1, 1], [], []>} : vector<128x256xbf16>, vector<256x256xbf16>, vector<128x256xf32> -> vector<128x256xf32>
    %c0_3 = arith.constant 0 : index
    %c0_4 = arith.constant 0 : index
    %3 = vector.load %arg3[%c0_3, %c0_4] : memref<1x256xf32, #tpu.memory_space<vmem>>, vector<1x256xf32>
    %4 = vector.broadcast %3 : vector<1x256xf32> to vector<128x256xf32>
    %5 = arith.addf %2, %4 : vector<128x256xf32>
    %cst_5 = arith.constant 2.000000e-01 : f32
    %6 = vector.broadcast %cst_5 : f32 to vector<128x256xf32>
    %7 = arith.mulf %6, %5 : vector<128x256xf32>
    %8 = arith.maximumf %5, %7 : vector<128x256xf32>
    %9 = arith.truncf %8 : vector<128x256xf32> to vector<128x256xbf16>
    %c0_6 = arith.constant 0 : index
    %c0_7 = arith.constant 0 : index
    %10 = vector.load %arg4[%c0_6, %c0_7] : memref<256x256xbf16, #tpu.memory_space<vmem>>, vector<256x256xbf16>
    %cst_8 = arith.constant dense<0.000000e+00> : vector<128x256xf32>
    %11 = tpu.matmul %9, %10, %cst_8 {dimension_numbers = #tpu.dot_dimension_numbers<[1], [0], [0], [1], [0, 0, 1, 1], [], []>} : vector<128x256xbf16>, vector<256x256xbf16>, vector<128x256xf32> -> vector<128x256xf32>
    %c0_9 = arith.constant 0 : index
    %c0_10 = arith.constant 0 : index
    %12 = vector.load %arg5[%c0_9, %c0_10] : memref<1x256xf32, #tpu.memory_space<vmem>>, vector<1x256xf32>
    %13 = vector.broadcast %12 : vector<1x256xf32> to vector<128x256xf32>
    %14 = arith.addf %11, %13 : vector<128x256xf32>
    %c0_11 = arith.constant 0 : index
    %c0_12 = arith.constant 0 : index
    %15 = vector.load %arg6[%c0_11, %c0_12] : memref<128x256xf32, #tpu.memory_space<vmem>>, vector<128x256xf32>
    tpu.vector_store %arg6[%c0_11, %c0_12], %14 {strides = array<i32>} : memref<128x256xf32, #tpu.memory_space<vmem>>, vector<128x256xf32>,
    return
  }
  func.func @transform_0(%arg0: i32) -> (i32, i32) {
    %c0_i32 = arith.constant 0 : i32
    %c0_i32_0 = arith.constant 0 : i32
    return %arg0, %c0_i32 : i32, i32
  }
  func.func @transform_1(%arg0: i32) -> (i32, i32) {
    %c0_i32 = arith.constant 0 : i32
    %c0_i32_0 = arith.constant 0 : i32
    %c0_i32_1 = arith.constant 0 : i32
    return %c0_i32, %c0_i32_0 : i32, i32
  }
  func.func @transform_2(%arg0: i32) -> (i32, i32) {
    %c0_i32 = arith.constant 0 : i32
    %c0_i32_0 = arith.constant 0 : i32
    %c0_i32_1 = arith.constant 0 : i32
    return %c0_i32, %c0_i32_0 : i32, i32
  }
  func.func @transform_3(%arg0: i32) -> (i32, i32) {
    %c0_i32 = arith.constant 0 : i32
    %c0_i32_0 = arith.constant 0 : i32
    %c0_i32_1 = arith.constant 0 : i32
    return %c0_i32, %c0_i32_0 : i32, i32
  }
  func.func @transform_4(%arg0: i32) -> (i32, i32) {
    %c0_i32 = arith.constant 0 : i32
    %c0_i32_0 = arith.constant 0 : i32
    %c0_i32_1 = arith.constant 0 : i32
    return %c0_i32, %c0_i32_0 : i32, i32
  }
  func.func @transform_5(%arg0: i32) -> (i32, i32) {
    %c0_i32 = arith.constant 0 : i32
    %c0_i32_0 = arith.constant 0 : i32
    return %arg0, %c0_i32 : i32, i32
  }
}

module attributes {stable_mosaic.version = 11 : i64} {
  func.func @_generator_kernel(%arg0: i32, %arg1: memref<128x256xbf16, #tpu.memory_space<vmem>>, %arg2: memref<256x256xbf16, #tpu.memory_space<vmem>>, %arg3: memref<1x256xf32, #tpu.memory_space<vmem>>, %arg4: memref<256x256xbf16, #tpu.memory_space<vmem>>, %arg5: memref<1x256xf32, #tpu.memory_space<vmem>>, %arg6: memref<128x256xf32, #tpu.memory_space<vmem>>) attributes {dimension_semantics = [#tpu.dimension_semantics<parallel>], iteration_bounds = array<i64: 2>, scalar_prefetch = 0 : i64, scratch_operands = 0 : i64, tpu.core_type = #tpu.core_type<tc>, window_params = [{transform_indices = @transform_0, window_bounds = array<i64: 128, 256>}, {pipeline_mode = #tpu.pipeline_mode<synchronous>, transform_indices = @transform_1, window_bounds = array<i64: 256, 256>}, {pipeline_mode = #tpu.pipeline_mode<synchronous>, transform_indices = @transform_2, window_bounds = array<i64: 1, 256>}, {pipeline_mode = #tpu.pipeline_mode<synchronous>, transform_indices = @transform_3, window_bounds = array<i64: 256, 256>}, {pipeline_mode = #tpu.pipeline_mode<synchronous>, transform_indices = @transform_4, window_bounds = array<i64: 1, 256>}, {transform_indices = @transform_5, window_bounds = array<i64: 128, 256>}]} {
    %c0 = arith.constant 0 : index
    %c0_0 = arith.constant 0 : index
    %0 = vector.load %arg1[%c0, %c0_0] : memref<128x256xbf16, #tpu.memory_space<vmem>>, vector<128x256xbf16>
    %c0_1 = arith.constant 0 : index
    %c0_2 = arith.constant 0 : index
    %1 = vector.load %arg2[%c0_1, %c0_2] : memref<256x256xbf16, #tpu.memory_space<vmem>>, vector<256x256xbf16>
    %cst = arith.constant dense<0.000000e+00> : vector<128x256xf32>
    %2 = tpu.matmul %0, %1, %cst {dimension_numbers = #tpu.dot_dimension_numbers<[1], [0], [0], [1], [0, 0, 1, 1], [], []>} : vector<128x256xbf16>, vector<256x256xbf16>, vector<128x256xf32> -> vector<128x256xf32>
    %c0_3 = arith.constant 0 : index
    %c0_4 = arith.constant 0 : index
    %3 = vector.load %arg3[%c0_3, %c0_4] : memref<1x256xf32, #tpu.memory_space<vmem>>, vector<1x256xf32>
    %4 = vector.broadcast %3 : vector<1x256xf32> to vector<128x256xf32>
    %5 = arith.addf %2, %4 : vector<128x256xf32>
    %cst_5 = arith.constant 2.000000e-01 : f32
    %6 = vector.broadcast %cst_5 : f32 to vector<128x256xf32>
    %7 = arith.mulf %6, %5 : vector<128x256xf32>
    %8 = arith.maximumf %5, %7 : vector<128x256xf32>
    %9 = arith.truncf %8 : vector<128x256xf32> to vector<128x256xbf16>
    %c0_6 = arith.constant 0 : index
    %c0_7 = arith.constant 0 : index
    %10 = vector.load %arg4[%c0_6, %c0_7] : memref<256x256xbf16, #tpu.memory_space<vmem>>, vector<256x256xbf16>
    %cst_8 = arith.constant dense<0.000000e+00> : vector<128x256xf32>
    %11 = tpu.matmul %9, %10, %cst_8 {dimension_numbers = #tpu.dot_dimension_numbers<[1], [0], [0], [1], [0, 0, 1, 1], [], []>} : vector<128x256xbf16>, vector<256x256xbf16>, vector<128x256xf32> -> vector<128x256xf32>
    %c0_9 = arith.constant 0 : index
    %c0_10 = arith.constant 0 : index
    %12 = vector.load %arg5[%c0_9, %c0_10] : memref<1x256xf32, #tpu.memory_space<vmem>>, vector<1x256xf32>
    %13 = vector.broadcast %12 : vector<1x256xf32> to vector<128x256xf32>
    %14 = arith.addf %11, %13 : vector<128x256xf32>
    %c0_11 = arith.constant 0 : index
    %c0_12 = arith.constant 0 : index
    %15 = vector.load %arg6[%c0_11, %c0_12] : memref<128x256xf32, #tpu.memory_space<vmem>>, vector<128x256xf32>
    tpu.vector_store %arg6[%c0_11, %c0_12], %14 {strides = array<i32>} : memref<128x256xf32, #tpu.memory_space<vmem>>, vector<128x256xf32>,
    return
  }
  func.func @transform_0(%arg0: i32) -> (i32, i32) {
    %c0_i32 = arith.constant 0 : i32
    %c0_i32_0 = arith.constant 0 : i32
    return %arg0, %c0_i32 : i32, i32
  }
  func.func @transform_1(%arg0: i32) -> (i32, i32) {
    %c0_i32 = arith.constant 0 : i32
    %c0_i32_0 = arith.constant 0 : i32
    %c0_i32_1 = arith.constant 0 : i32
    return %c0_i32, %c0_i32_0 : i32, i32
  }
  func.func @transform_2(%arg0: i32) -> (i32, i32) {
    %c0_i32 = arith.constant 0 : i32
    %c0_i32_0 = arith.constant 0 : i32
    %c0_i32_1 = arith.constant 0 : i32
    return %c0_i32, %c0_i32_0 : i32, i32
  }
  func.func @transform_3(%arg0: i32) -> (i32, i32) {
    %c0_i32 = arith.constant 0 : i32
    %c0_i32_0 = arith.constant 0 : i32
    %c0_i32_1 = arith.constant 0 : i32
    return %c0_i32, %c0_i32_0 : i32, i32
  }
  func.func @transform_4(%arg0: i32) -> (i32, i32) {
    %c0_i32 = arith.constant 0 : i32
    %c0_i32_0 = arith.constant 0 : i32
    %c0_i32_1 = arith.constant 0 : i32
    return %c0_i32, %c0_i32_0 : i32, i32
  }
  func.func @transform_5(%arg0: i32) -> (i32, i32) {
    %c0_i32 = arith.constant 0 : i32
    %c0_i32_0 = arith.constant 0 : i32
    return %arg0, %c0_i32 : i32, i32
  }
}

</mosaic_0001>

<llo_original>
// kernel: tpu_custom_call.1
$region0: #{tpu_custom_call.1}
  #allocation0 [shape = 'u32[]', space=smem, size = 0x4, offset = 0x4, fixed_abs, tag = 'smem constant byte address 0x4 - core index']
  #allocation1 [shape = 'u32[72,128]{1,0:T(1,128)}', space=vmem, size = 0x9000, scoped, tag = 'internal scratch']
  %s0 = inlined_call_operand.hbm [shape: bf16[256,256], index: 0, kind: input, shape index: {}]
  %s1 = inlined_call_operand.hbm [shape: bf16[256,256], index: 1, kind: input, shape index: {}]
  %s2 = inlined_call_operand.hbm [shape: f32[1,256], index: 2, kind: input, shape index: {}]
  %s3 = inlined_call_operand.hbm [shape: bf16[256,256], index: 3, kind: input, shape index: {}]
  %s4 = inlined_call_operand.vmem [shape: f32[1,256], index: 4, kind: input, shape index: {}]
  %s5 = inlined_call_operand.hbm [shape: f32[256,256], index: 5, kind: output, shape index: {}]
  %s6 = sld [smem:[#allocation0]]
  $region69: #{tpu_custom_call.1} parent=0
    _
  %s8 = ssub.s32 1, %s6
  %s9 = scalar_select 0, %s8, %s6
  $region1: #{tpu_custom_call.1} parent=0
    #allocation2 [shape = 'u8[131072]{0}', space=vmem, size = 0x20000, scoped, tag = 'input window, operand 0']
    #allocation3 [shape = 's32[2]{0}', space=sflag, size = 0x8, scoped, tag = 'scoped memory for tpu_custom_call.1']
    #allocation4 [shape = 's32[2]{0}', space=sflag, size = 0x8, scoped, tag = 'scoped memory for tpu_custom_call.1']
    #allocation5 [shape = 'u8[131072]{0}', space=vmem, size = 0x20000, scoped, tag = 'input window, operand 1, single buffered']
    #allocation6 [shape = 's32[1]{0}', space=sflag, size = 0x4, scoped, tag = 'scoped memory for tpu_custom_call.1']
    #allocation7 [shape = 'u8[1024]{0}', space=vmem, size = 0x400, scoped, tag = 'input window, operand 2, single buffered']
    #allocation8 [shape = 'u8[131072]{0}', space=vmem, size = 0x20000, scoped, tag = 'input window, operand 3, single buffered']
    #allocation9 [shape = 's32[1]{0}', space=sflag, size = 0x4, scoped, tag = 'scoped memory for tpu_custom_call.1']
    #allocation10 [shape = 'u8[262144]{0}', space=vmem, size = 0x40000, scoped, tag = 'output window, operand 0']
    %10 = vsyncpa [#allocation3], 0
    %s11 = scalar_lea.sflag [#allocation3], 1
    %12 = vsyncpa %s11, 0
    %13 = vsyncpa [#allocation6], 0
    %14 = vsyncpa [#allocation9], 0
    %15 = vsyncpa [#allocation4], 0
    %s16 = scalar_lea.sflag [#allocation4], 1
    %17 = vsyncpa %s16, 0
    loop: start=0, step=1, limit=4
    $region2: #{tpu_custom_call.1} parent=1 // loop_pre_header
      _
    $region3: #{tpu_custom_call.1} parent=1 // loop_header
      %s19 = sphi 0, %s23
      %p20 = scmp.ge.s32.totalorder %s19, 4
      %s29 = sphi 0, %s31
      %s32 = sphi 0, %s29
      %s33 = sphi 0, %s32
      %s49 = sphi 0, %s33
      %s53 = sphi 0, %s53
      %s55 = sphi 0, %s53
      %s56 = sphi 0, %s55
      %s70 = sphi 0, %s56
      %s74 = sphi 0, %s74
      %s76 = sphi 0, %s74
      %s77 = sphi 0, %s76
      %s91 = sphi 0, %s77
      %s95 = sphi 0, %s95
      %s97 = sphi 0, %s95
      %s98 = sphi 0, %s97
      %s112 = sphi 0, %s98
      %s116 = sphi 0, %s116
      %s118 = sphi 0, %s116
      %s119 = sphi 0, %s118
      %s133 = sphi 0, %s119
      %s139 = sphi 0, %s141
      %s142 = sphi 0, %s139
      %s143 = sphi 0, %s142
      %s159 = sphi 0, %s143
    $region4: #{tpu_custom_call.1} parent=1 // loop_header_branch
      %22 = sbr.rel (%p20) target = $region8
    $region5: #{tpu_custom_call.1} parent=1 // loop_body
      %s24 = ssub.s32 %s19, 1
      %s25 = ssub.s32 %s19, 2
      %s26 = sadd.s32 %s19, 1
      %s27 = ssub.s32 %s19, %s26
      %p28 = scmp.eq.s32.totalorder %s27, 0
      %s30 = sadd.s32 %s29, 1
      %s31 = scalar_select %p28, %s29, %s30
      %p34 = pneg %p28
      %p35 = scmp.eq.s32.totalorder %s19, 1
      %p36 = por %p34, %p35
      %p37 = scmp.ne.s32.totalorder %s29, %s32
      %p38 = scmp.eq.s32.totalorder %s19, 0
      %p39 = por %p37, %p38
      %p40 = scmp.ne.s32.totalorder %s29, %s32
      %p41 = scmp.eq.s32.totalorder %s24, 1
      %p42 = por %p40, %p41
      %p43 = scmp.ne.s32.totalorder %s32, %s33
      %p44 = scmp.eq.s32.totalorder %s24, 0
      %p45 = por %p43, %p44
      %p46 = scmp.ne.s32.totalorder %s32, %s33
      %p47 = scmp.eq.s32.totalorder %s25, 1
      %p48 = por %p46, %p47
      %p50 = scmp.ne.s32.totalorder %s33, %s49
      %p51 = scmp.eq.s32.totalorder %s25, 0
      %p52 = por %p50, %p51
      %s54 = sadd.s32 %s53, 1
      %p57 = scmp.eq.s32.totalorder %s19, 1
      %p58 = scmp.ne.s32.totalorder %s53, %s55
      %p59 = scmp.eq.s32.totalorder %s19, 0
      %p60 = por %p58, %p59
      %p61 = scmp.ne.s32.totalorder %s53, %s55
      %p62 = scmp.eq.s32.totalorder %s24, 1
      %p63 = por %p61, %p62
      %p64 = scmp.ne.s32.totalorder %s55, %s56
      %p65 = scmp.eq.s32.totalorder %s24, 0
      %p66 = por %p64, %p65
      %p67 = scmp.ne.s32.totalorder %s55, %s56
      %p68 = scmp.eq.s32.totalorder %s25, 1
      %p69 = por %p67, %p68
      %p71 = scmp.ne.s32.totalorder %s56, %s70
      %p72 = scmp.eq.s32.totalorder %s25, 0
      %p73 = por %p71, %p72
      %s75 = sadd.s32 %s74, 1
      %p78 = scmp.eq.s32.totalorder %s19, 1
      %p79 = scmp.ne.s32.totalorder %s74, %s76
      %p80 = scmp.eq.s32.totalorder %s19, 0
      %p81 = por %p79, %p80
      %p82 = scmp.ne.s32.totalorder %s74, %s76
      %p83 = scmp.eq.s32.totalorder %s24, 1
      %p84 = por %p82, %p83
      %p85 = scmp.ne.s32.totalorder %s76, %s77
      %p86 = scmp.eq.s32.totalorder %s24, 0
      %p87 = por %p85, %p86
      %p88 = scmp.ne.s32.totalorder %s76, %s77
      %p89 = scmp.eq.s32.totalorder %s25, 1
      %p90 = por %p88, %p89
      %p92 = scmp.ne.s32.totalorder %s77, %s91
      %p93 = scmp.eq.s32.totalorder %s25, 0
      %p94 = por %p92, %p93
      %s96 = sadd.s32 %s95, 1
      %p99 = scmp.eq.s32.totalorder %s19, 1
      %p100 = scmp.ne.s32.totalorder %s95, %s97
      %p101 = scmp.eq.s32.totalorder %s19, 0
      %p102 = por %p100, %p101
      %p103 = scmp.ne.s32.totalorder %s95, %s97
      %p104 = scmp.eq.s32.totalorder %s24, 1
      %p105 = por %p103, %p104
      %p106 = scmp.ne.s32.totalorder %s97, %s98
      %p107 = scmp.eq.s32.totalorder %s24, 0
      %p108 = por %p106, %p107
      %p109 = scmp.ne.s32.totalorder %s97, %s98
      %p110 = scmp.eq.s32.totalorder %s25, 1
      %p111 = por %p109, %p110
      %p113 = scmp.ne.s32.totalorder %s98, %s112
      %p114 = scmp.eq.s32.totalorder %s25, 0
      %p115 = por %p113, %p114
      %s117 = sadd.s32 %s116, 1
      %p120 = scmp.eq.s32.totalorder %s19, 1
      %p121 = scmp.ne.s32.totalorder %s116, %s118
      %p122 = scmp.eq.s32.totalorder %s19, 0
      %p123 = por %p121, %p122
      %p124 = scmp.ne.s32.totalorder %s116, %s118
      %p125 = scmp.eq.s32.totalorder %s24, 1
      %p126 = por %p124, %p125
      %p127 = scmp.ne.s32.totalorder %s118, %s119
      %p128 = scmp.eq.s32.totalorder %s24, 0
      %p129 = por %p127, %p128
      %p130 = scmp.ne.s32.totalorder %s118, %s119
      %p131 = scmp.eq.s32.totalorder %s25, 1
      %p132 = por %p130, %p131
      %p134 = scmp.ne.s32.totalorder %s119, %s133
      %p135 = scmp.eq.s32.totalorder %s25, 0
      %p136 = por %p134, %p135
      %s137 = ssub.s32 %s19, %s26
      %p138 = scmp.eq.s32.totalorder %s137, 0
      %s140 = sadd.s32 %s139, 1
      %s141 = scalar_select %p138, %s139, %s140
      %p144 = pneg %p138
      %p145 = scmp.eq.s32.totalorder %s19, 1
      %p146 = por %p144, %p145
      %p147 = scmp.ne.s32.totalorder %s139, %s142
      %p148 = scmp.eq.s32.totalorder %s19, 0
      %p149 = por %p147, %p148
      %p150 = scmp.ne.s32.totalorder %s139, %s142
      %p151 = scmp.eq.s32.totalorder %s24, 1
      %p152 = por %p150, %p151
      %p153 = scmp.ne.s32.totalorder %s142, %s143
      %p154 = scmp.eq.s32.totalorder %s24, 0
      %p155 = por %p153, %p154
      %p156 = scmp.ne.s32.totalorder %s142, %s143
      %p157 = scmp.eq.s32.totalorder %s25, 1
      %p158 = por %p156, %p157
      %p160 = scmp.ne.s32.totalorder %s143, %s159
      %p161 = scmp.eq.s32.totalorder %s25, 0
      %p162 = por %p160, %p161
      %p163 = scmp.le.s32.totalorder 1, %s19
      %p164 = scmp.lt.s32.totalorder %s19, 3
      %p165 = pnand %p163, %p164
      %p166 = pneg %p165
      // Predicated region
      $region9: #{tpu_custom_call.1} parent=5 // pred_check
        _
      $region10: #{tpu_custom_call.1} parent=5 // pred_check_branch
        %168 = sbr.rel (%p165) target = $region12
      $region11: #{tpu_custom_call.1} parent=5 // pred_region
        %s169 = ssub.s32 %s19, 1
        // Predicated region
        $region13: #{tpu_custom_call.1} parent=11 // pred_check
          %p170 = pneg %p66
        $region14: #{tpu_custom_call.1} parent=11 // pred_check_branch
          %172 = sbr.rel (%p170) target = $region16
        $region15: #{tpu_custom_call.1} parent=11 // pred_region
          %174 = vsyncadd [#allocation6], 0
          %s175 = sshll.u32 %s1, 4
          %s176 = int_to_ptr.hbm [resolvable:$true] %s175
          %s177 = sshll.u32 [#allocation5], 4
          %s178 = int_to_ptr.vmem [resolvable:$true] %s177
          %183 = dma.hbm_to_vmem [thread:$0]  %s176, 4096, %s178, [#allocation6], 128, 128, 8
        $region16: #{tpu_custom_call.1} parent=11 // pred_fallthru
          _
        // Predicated region
        $region17: #{tpu_custom_call.1} parent=11 // pred_check
          %p184 = pneg %p87
        $region18: #{tpu_custom_call.1} parent=11 // pred_check_branch
          %186 = sbr.rel (%p184) target = $region20
        $region19: #{tpu_custom_call.1} parent=11 // pred_region
          %188 = vsyncadd [#allocation6], 0
          %s190 = sshll.u32 %s2, 4
          %s191 = int_to_ptr.hbm [resolvable:$true] %s190
          %s192 = sshll.u32 [#allocation7], 4
          %s193 = int_to_ptr.vmem [resolvable:$true] %s192
          %195 = dma.hbm_to_vmem [thread:$0]  %s191, 32, %s193, [#allocation6]
        $region20: #{tpu_custom_call.1} parent=11 // pred_fallthru
          _
        // Predicated region
        $region21: #{tpu_custom_call.1} parent=11 // pred_check
          %p196 = pneg %p108
        $region22: #{tpu_custom_call.1} parent=11 // pred_check_branch
          %198 = sbr.rel (%p196) target = $region24
        $region23: #{tpu_custom_call.1} parent=11 // pred_region
          %200 = vsyncadd [#allocation9], 0
          %s201 = sshll.u32 %s3, 4
          %s202 = int_to_ptr.hbm [resolvable:$true] %s201
          %s203 = sshll.u32 [#allocation8], 4
          %s204 = int_to_ptr.vmem [resolvable:$true] %s203
          %209 = dma.hbm_to_vmem [thread:$0]  %s202, 4096, %s204, [#allocation9], 128, 128, 8
        $region24: #{tpu_custom_call.1} parent=11 // pred_fallthru
          _
        // Predicated region
        $region25: #{tpu_custom_call.1} parent=11 // pred_check
          %p210 = pneg %p129
        $region26: #{tpu_custom_call.1} parent=11 // pred_check_branch
          %212 = sbr.rel (%p210) target = $region28
        $region27: #{tpu_custom_call.1} parent=11 // pred_region
          _
        $region28: #{tpu_custom_call.1} parent=11 // pred_fallthru
          _
      $region12: #{tpu_custom_call.1} parent=5 // pred_fallthru
        _
      %p213 = scmp.lt.s32.totalorder %s19, 2
      // Predicated region
      $region29: #{tpu_custom_call.1} parent=5 // pred_check
        %p214 = pneg %p213
      $region30: #{tpu_custom_call.1} parent=5 // pred_check_branch
        %216 = sbr.rel (%p214) target = $region32
      $region31: #{tpu_custom_call.1} parent=5 // pred_region
        // Predicated region
        $region33: #{tpu_custom_call.1} parent=31 // pred_check
          %p217 = pneg %p39
        $region34: #{tpu_custom_call.1} parent=31 // pred_check_branch
          %219 = sbr.rel (%p217) target = $region36
        $region35: #{tpu_custom_call.1} parent=31 // pred_region
          %s220 = sand.u32 %s29, 1
          %s221 = scalar_lea.sflag [#allocation3], %s220
          %s222 = sand.u32 %s29, 1
          %s223 = smul.addr %s222, 128
          %s224 = scalar_lea.vmem [#allocation2], %s223
          %s225 = smul.u32 16, %s19
          %227 = vsyncadd %s221, 0
          %s228 = smul.addr %s225, 2
          %s229 = smul.addr %s228, 4
          %s230 = scalar_lea.hbm %s0, %s229
          %s231 = sshll.u32 %s230, 4
          %s232 = int_to_ptr.hbm [resolvable:$true] %s231
          %s233 = sshll.u32 %s224, 4
          %s234 = int_to_ptr.vmem [resolvable:$true] %s233
          %239 = dma.hbm_to_vmem [thread:$0]  %s232, 2048, %s234, %s221, 128, 128, 8
        $region36: #{tpu_custom_call.1} parent=31 // pred_fallthru
          _
      $region32: #{tpu_custom_call.1} parent=5 // pred_fallthru
        _
      %p240 = scmp.le.s32.totalorder 1, %s19
      %p241 = scmp.lt.s32.totalorder %s19, 3
      %p242 = pnand %p240, %p241
      %p243 = pneg %p242
      // Predicated region
      $region37: #{tpu_custom_call.1} parent=5 // pred_check
        _
      $region38: #{tpu_custom_call.1} parent=5 // pred_check_branch
        %245 = sbr.rel (%p242) target = $region40
      $region39: #{tpu_custom_call.1} parent=5 // pred_region
        %s246 = ssub.s32 %s19, 1
        %s247 = sand.u32 %s32, 1
        %s248 = scalar_lea.sflag [#allocation3], %s247
        %s249 = sand.u32 %s32, 1
        %s250 = smul.addr %s249, 128
        %s251 = scalar_lea.vmem [#allocation2], %s250
        // Predicated region
        $region41: #{tpu_custom_call.1} parent=39 // pred_check
          %p252 = pneg %p45
        $region42: #{tpu_custom_call.1} parent=39 // pred_check_branch
          %254 = sbr.rel (%p252) target = $region44
        $region43: #{tpu_custom_call.1} parent=39 // pred_region
          %256 = dma.done %s248, 2048
        $region44: #{tpu_custom_call.1} parent=39 // pred_fallthru
          _
        // Predicated region
        $region45: #{tpu_custom_call.1} parent=39 // pred_check
          %p257 = pneg %p66
        $region46: #{tpu_custom_call.1} parent=39 // pred_check_branch
          %259 = sbr.rel (%p257) target = $region48
        $region47: #{tpu_custom_call.1} parent=39 // pred_region
          %261 = dma.done [#allocation6], 4096
        $region48: #{tpu_custom_call.1} parent=39 // pred_fallthru
          _
        // Predicated region
        $region49: #{tpu_custom_call.1} parent=39 // pred_check
          %p262 = pneg %p87
        $region50: #{tpu_custom_call.1} parent=39 // pred_check_branch
          %264 = sbr.rel (%p262) target = $region52
        $region51: #{tpu_custom_call.1} parent=39 // pred_region
          %266 = dma.done [#allocation6], 32
        $region52: #{tpu_custom_call.1} parent=39 // pred_fallthru
          _
        // Predicated region
        $region53: #{tpu_custom_call.1} parent=39 // pred_check
          %p267 = pneg %p108
        $region54: #{tpu_custom_call.1} parent=39 // pred_check_branch
          %269 = sbr.rel (%p267) target = $region56
        $region55: #{tpu_custom_call.1} parent=39 // pred_region
          %271 = dma.done [#allocation9], 4096
        $region56: #{tpu_custom_call.1} parent=39 // pred_fallthru
          _
        %s272 = sand.u32 %s32, 1
        %s273 = scalar_lea.sflag [#allocation3], %s272
        %s274 = sand.u32 %s32, 1
        %s275 = smul.addr %s274, 128
        %s276 = scalar_lea.vmem [#allocation2], %s275
        %p277 = pneg %p45
        %p278 = pneg %p42
        %p279 = pneg %p66
        %p280 = pneg %p63
        %p281 = pneg %p87
        %p282 = pneg %p84
        %p283 = pneg %p108
        %p284 = pneg %p105
        %p285 = pneg %p129
        %p286 = pneg %p126
        %p287 = pneg %p155
        %p288 = pneg %p152
        %s289 = sand.u32 %s142, 1
        %s290 = scalar_lea.sflag [#allocation4], %s289
        %s291 = sand.u32 %s142, 1
        %s292 = smul.addr %s291, 256
        %s293 = scalar_lea.vmem [#allocation10], %s292
        %s294 = smul.u32 16, %s24
        %s295 = smul.u32 16, %s24
        %v296 = vld [vmem:[%s251] sm:$0xff]
        %v297 = vld [vmem:[%s251 + $0x8] sm:$0xff]
        %v298 = vld [vmem:[%s251 + $0x10] sm:$0xff]
        %v299 = vld [vmem:[%s251 + $0x18] sm:$0xff]
        %v300 = vld [vmem:[%s251 + $0x20] sm:$0xff]
        %v301 = vld [vmem:[%s251 + $0x28] sm:$0xff]
        %v302 = vld [vmem:[%s251 + $0x30] sm:$0xff]
        %v303 = vld [vmem:[%s251 + $0x38] sm:$0xff]
        %v304 = vld [vmem:[%s251 + $0x40] sm:$0xff]
        %v305 = vld [vmem:[%s251 + $0x48] sm:$0xff]
        %v306 = vld [vmem:[%s251 + $0x50] sm:$0xff]
        %v307 = vld [vmem:[%s251 + $0x58] sm:$0xff]
        %v308 = vld [vmem:[%s251 + $0x60] sm:$0xff]
        %v309 = vld [vmem:[%s251 + $0x68] sm:$0xff]
        %v310 = vld [vmem:[%s251 + $0x70] sm:$0xff]
        %v311 = vld [vmem:[%s251 + $0x78] sm:$0xff]
        %v312 = vld [vmem:[#allocation5] sm:$0xff]
        %v313 = vld [vmem:[#allocation5 + $0x8] sm:$0xff]
        %v314 = vld [vmem:[#allocation5 + $0x10] sm:$0xff]
        %v315 = vld [vmem:[#allocation5 + $0x18] sm:$0xff]
        %v316 = vld [vmem:[#allocation5 + $0x20] sm:$0xff]
        %v317 = vld [vmem:[#allocation5 + $0x28] sm:$0xff]
        %v318 = vld [vmem:[#allocation5 + $0x30] sm:$0xff]
        %v319 = vld [vmem:[#allocation5 + $0x38] sm:$0xff]
        %v320 = vld [vmem:[#allocation5 + $0x40] sm:$0xff]
        %v321 = vld [vmem:[#allocation5 + $0x48] sm:$0xff]
        %v322 = vld [vmem:[#allocation5 + $0x50] sm:$0xff]
        %v323 = vld [vmem:[#allocation5 + $0x58] sm:$0xff]
        %v324 = vld [vmem:[#allocation5 + $0x60] sm:$0xff]
        %v325 = vld [vmem:[#allocation5 + $0x68] sm:$0xff]
        %v326 = vld [vmem:[#allocation5 + $0x70] sm:$0xff]
        %v327 = vld [vmem:[#allocation5 + $0x78] sm:$0xff]
        %v328 = vld [vmem:[#allocation5 + $0x80] sm:$0xff]
        %v329 = vld [vmem:[#allocation5 + $0x88] sm:$0xff]
        %v330 = vld [vmem:[#allocation5 + $0x90] sm:$0xff]
        %v331 = vld [vmem:[#allocation5 + $0x98] sm:$0xff]
        %v332 = vld [vmem:[#allocation5 + $0xa0] sm:$0xff]
        %v333 = vld [vmem:[#allocation5 + $0xa8] sm:$0xff]
        %v334 = vld [vmem:[#allocation5 + $0xb0] sm:$0xff]
        %v335 = vld [vmem:[#allocation5 + $0xb8] sm:$0xff]
        %v336 = vld [vmem:[#allocation5 + $0xc0] sm:$0xff]
        %v337 = vld [vmem:[#allocation5 + $0xc8] sm:$0xff]
        %v338 = vld [vmem:[#allocation5 + $0xd0] sm:$0xff]
        %v339 = vld [vmem:[#allocation5 + $0xd8] sm:$0xff]
        %v340 = vld [vmem:[#allocation5 + $0xe0] sm:$0xff]
        %v341 = vld [vmem:[#allocation5 + $0xe8] sm:$0xff]
        %v342 = vld [vmem:[#allocation5 + $0xf0] sm:$0xff]
        %v343 = vld [vmem:[#allocation5 + $0xf8] sm:$0xff]
        %v344 = vld [vmem:[#allocation7] sm:$0x3]
        %v346 = vperm.slane %v344, 0
        %v347 = vperm.slane %v344, 1
        %v366 = vunpack.c.l.b16 %v296
        %v367 = vunpack.c.h.b16 %v296
        %v368 = vunpack.c.l.b16 %v297
        %v369 = vunpack.c.h.b16 %v297
        %v370 = vunpack.c.l.b16 %v298
        %v371 = vunpack.c.h.b16 %v298
        %v372 = vunpack.c.l.b16 %v299
        %v373 = vunpack.c.h.b16 %v299
        %v374 = vunpack.c.l.b16 %v300
        %v375 = vunpack.c.h.b16 %v300
        %v376 = vunpack.c.l.b16 %v301
        %v377 = vunpack.c.h.b16 %v301
        %v378 = vunpack.c.l.b16 %v302
        %v379 = vunpack.c.h.b16 %v302
        %v380 = vunpack.c.l.b16 %v303
        %v381 = vunpack.c.h.b16 %v303
        %v382 = vunpack.c.l.b16 %v304
        %v383 = vunpack.c.h.b16 %v304
        %v384 = vunpack.c.l.b16 %v305
        %v385 = vunpack.c.h.b16 %v305
        %v386 = vunpack.c.l.b16 %v306
        %v387 = vunpack.c.h.b16 %v306
        %v388 = vunpack.c.l.b16 %v307
        %v389 = vunpack.c.h.b16 %v307
        %v390 = vunpack.c.l.b16 %v308
        %v391 = vunpack.c.h.b16 %v308
        %v392 = vunpack.c.l.b16 %v309
        %v393 = vunpack.c.h.b16 %v309
        %v394 = vunpack.c.l.b16 %v310
        %v395 = vunpack.c.h.b16 %v310
        %v396 = vunpack.c.l.b16 %v311
        %v397 = vunpack.c.h.b16 %v311
        %v398 = vpack.c.b16 %v368, %v366
        %v399 = vpack.c.b16 %v369, %v367
        %v400 = vpack.c.b16 %v372, %v370
        %v401 = vpack.c.b16 %v373, %v371
        %v402 = vpack.c.b16 %v376, %v374
        %v403 = vpack.c.b16 %v377, %v375
        %v404 = vpack.c.b16 %v380, %v378
        %v405 = vpack.c.b16 %v381, %v379
        %v406 = vpack.c.b16 %v384, %v382
        %v407 = vpack.c.b16 %v385, %v383
        %v408 = vpack.c.b16 %v388, %v386
        %v409 = vpack.c.b16 %v389, %v387
        %v410 = vpack.c.b16 %v392, %v390
        %v411 = vpack.c.b16 %v393, %v391
        %v412 = vpack.c.b16 %v396, %v394
        %v413 = vpack.c.b16 %v397, %v395
        %v462 = vunpack.c.l.b16 %v312
        %v463 = vunpack.c.h.b16 %v312
        %v464 = vunpack.c.l.b16 %v313
        %v465 = vunpack.c.h.b16 %v313
        %v466 = vunpack.c.l.b16 %v314
        %v467 = vunpack.c.h.b16 %v314
        %v468 = vunpack.c.l.b16 %v315
        %v469 = vunpack.c.h.b16 %v315
        %v470 = vunpack.c.l.b16 %v316
        %v471 = vunpack.c.h.b16 %v316
        %v472 = vunpack.c.l.b16 %v317
        %v473 = vunpack.c.h.b16 %v317
        %v474 = vunpack.c.l.b16 %v318
        %v475 = vunpack.c.h.b16 %v318
        %v476 = vunpack.c.l.b16 %v319
        %v477 = vunpack.c.h.b16 %v319
        %v478 = vunpack.c.l.b16 %v320
        %v479 = vunpack.c.h.b16 %v320
        %v480 = vunpack.c.l.b16 %v321
        %v481 = vunpack.c.h.b16 %v321
        %v482 = vunpack.c.l.b16 %v322
        %v483 = vunpack.c.h.b16 %v322
        %v484 = vunpack.c.l.b16 %v323
        %v485 = vunpack.c.h.b16 %v323
        %v486 = vunpack.c.l.b16 %v324
        %v487 = vunpack.c.h.b16 %v324
        %v488 = vunpack.c.l.b16 %v325
        %v489 = vunpack.c.h.b16 %v325
        %v490 = vunpack.c.l.b16 %v326
        %v491 = vunpack.c.h.b16 %v326
        %v492 = vunpack.c.l.b16 %v327
        %v493 = vunpack.c.h.b16 %v327
        %v494 = vunpack.c.l.b16 %v328
        %v495 = vunpack.c.h.b16 %v328
        %v496 = vunpack.c.l.b16 %v329
        %v497 = vunpack.c.h.b16 %v329
        %v498 = vunpack.c.l.b16 %v330
        %v499 = vunpack.c.h.b16 %v330
        %v500 = vunpack.c.l.b16 %v331
        %v501 = vunpack.c.h.b16 %v331
        %v502 = vunpack.c.l.b16 %v332
        %v503 = vunpack.c.h.b16 %v332
        %v504 = vunpack.c.l.b16 %v333
        %v505 = vunpack.c.h.b16 %v333
        %v506 = vunpack.c.l.b16 %v334
        %v507 = vunpack.c.h.b16 %v334
        %v508 = vunpack.c.l.b16 %v335
        %v509 = vunpack.c.h.b16 %v335
        %v510 = vunpack.c.l.b16 %v336
        %v511 = vunpack.c.h.b16 %v336
        %v512 = vunpack.c.l.b16 %v337
        %v513 = vunpack.c.h.b16 %v337
        %v514 = vunpack.c.l.b16 %v338
        %v515 = vunpack.c.h.b16 %v338
        %v516 = vunpack.c.l.b16 %v339
        %v517 = vunpack.c.h.b16 %v339
        %v518 = vunpack.c.l.b16 %v340
        %v519 = vunpack.c.h.b16 %v340
        %v520 = vunpack.c.l.b16 %v341
        %v521 = vunpack.c.h.b16 %v341
        %v522 = vunpack.c.l.b16 %v342
        %v523 = vunpack.c.h.b16 %v342
        %v524 = vunpack.c.l.b16 %v343
        %v525 = vunpack.c.h.b16 %v343
        %v526 = vpack.c.b16 %v464, %v462
        %v527 = vpack.c.b16 %v465, %v463
        %v528 = vpack.c.b16 %v468, %v466
        %v529 = vpack.c.b16 %v469, %v467
        %v530 = vpack.c.b16 %v472, %v470
        %v531 = vpack.c.b16 %v473, %v471
        %v532 = vpack.c.b16 %v476, %v474
        %v533 = vpack.c.b16 %v477, %v475
        %v534 = vpack.c.b16 %v480, %v478
        %v535 = vpack.c.b16 %v481, %v479
        %v536 = vpack.c.b16 %v484, %v482
        %v537 = vpack.c.b16 %v485, %v483
        %v538 = vpack.c.b16 %v488, %v486
        %v539 = vpack.c.b16 %v489, %v487
        %v540 = vpack.c.b16 %v492, %v490
        %v541 = vpack.c.b16 %v493, %v491
        %v542 = vpack.c.b16 %v496, %v494
        %v543 = vpack.c.b16 %v497, %v495
        %v544 = vpack.c.b16 %v500, %v498
        %v545 = vpack.c.b16 %v501, %v499
        %v546 = vpack.c.b16 %v504, %v502
        %v547 = vpack.c.b16 %v505, %v503
        %v548 = vpack.c.b16 %v508, %v506
        %v549 = vpack.c.b16 %v509, %v507
        %v550 = vpack.c.b16 %v512, %v510
        %v551 = vpack.c.b16 %v513, %v511
        %v552 = vpack.c.b16 %v516, %v514
        %v553 = vpack.c.b16 %v517, %v515
        %v554 = vpack.c.b16 %v520, %v518
        %v555 = vpack.c.b16 %v521, %v519
        %v556 = vpack.c.b16 %v524, %v522
        %v557 = vpack.c.b16 %v525, %v523
        %590 = vmatpush.bf16.msra.mxu0 %v540
        %591 = vmatpush.bf16.msra.mxu0 %v538
        %592 = vmatpush.bf16.msra.mxu0 %v536
        %593 = vmatpush.bf16.msra.mxu0 %v534
        %594 = vmatpush.bf16.msra.mxu0 %v532
        %595 = vmatpush.bf16.msra.mxu0 %v530
        %596 = vmatpush.bf16.msra.mxu0 %v528
        %597 = vmatpush.bf16.msra.mxu0 %v526
        %598 = vmatmul.bf16.gmra.mxu0 %v398
        %v599 = vpop.f32.mrf.mxu0
        %v600 = vadd.f32 %v346, %v599
        %v601 = vpop.f32.mrf.mxu0
        %v602 = vadd.f32 %v346, %v601
        %603 = vmatmul.bf16.gmra.mxu0 %v400
        %v604 = vpop.f32.mrf.mxu0
        %v605 = vadd.f32 %v346, %v604
        %v606 = vpop.f32.mrf.mxu0
        %v607 = vadd.f32 %v346, %v606
        %608 = vmatmul.bf16.gmra.mxu0 %v402
        %v609 = vpop.f32.mrf.mxu0
        %v610 = vadd.f32 %v346, %v609
        %v611 = vpop.f32.mrf.mxu0
        %v612 = vadd.f32 %v346, %v611
        %613 = vmatmul.bf16.gmra.mxu0 %v404
        %v614 = vpop.f32.mrf.mxu0
        %v615 = vadd.f32 %v346, %v614
        %v616 = vpop.f32.mrf.mxu0
        %v617 = vadd.f32 %v346, %v616
        %618 = vmatmul.bf16.gmra.mxu0 %v406
        %v619 = vpop.f32.mrf.mxu0
        %v620 = vadd.f32 %v346, %v619
        %v621 = vpop.f32.mrf.mxu0
        %v622 = vadd.f32 %v346, %v621
        %623 = vmatmul.bf16.gmra.mxu0 %v408
        %v624 = vpop.f32.mrf.mxu0
        %v625 = vadd.f32 %v346, %v624
        %v626 = vpop.f32.mrf.mxu0
        %v627 = vadd.f32 %v346, %v626
        %628 = vmatmul.bf16.gmra.mxu0 %v410
        %v629 = vpop.f32.mrf.mxu0
        %v630 = vadd.f32 %v346, %v629
        %v631 = vpop.f32.mrf.mxu0
        %v632 = vadd.f32 %v346, %v631
        %633 = vmatmul.bf16.gmra.mxu0 %v412
        %v634 = vpop.f32.mrf.mxu0
        %v635 = vadd.f32 %v346, %v634
        %v636 = vpop.f32.mrf.mxu0
        %v637 = vadd.f32 %v346, %v636
        %638 = vdwg.mxu0
        %639 = vmatpush.bf16.msra.mxu0 %v556
        %640 = vmatpush.bf16.msra.mxu0 %v554
        %641 = vmatpush.bf16.msra.mxu0 %v552
        %642 = vmatpush.bf16.msra.mxu0 %v550
        %643 = vmatpush.bf16.msra.mxu0 %v548
        %644 = vmatpush.bf16.msra.mxu0 %v546
        %645 = vmatpush.bf16.msra.mxu0 %v544
        %646 = vmatpush.bf16.msra.mxu0 %v542
        %647 = vmatmul.bf16.gmra.mxu0 %v399
        %v648 = vpop.f32.mrf.mxu0
        %v649 = vadd.f32 %v600, %v648
        %v650 = vpop.f32.mrf.mxu0
        %v651 = vadd.f32 %v602, %v650
        %652 = vmatmul.bf16.gmra.mxu0 %v401
        %v653 = vpop.f32.mrf.mxu0
        %v654 = vadd.f32 %v605, %v653
        %v655 = vpop.f32.mrf.mxu0
        %v656 = vadd.f32 %v607, %v655
        %657 = vmatmul.bf16.gmra.mxu0 %v403
        %v658 = vpop.f32.mrf.mxu0
        %v659 = vadd.f32 %v610, %v658
        %v660 = vpop.f32.mrf.mxu0
        %v661 = vadd.f32 %v612, %v660
        %662 = vmatmul.bf16.gmra.mxu0 %v405
        %v663 = vpop.f32.mrf.mxu0
        %v664 = vadd.f32 %v615, %v663
        %v665 = vpop.f32.mrf.mxu0
        %v666 = vadd.f32 %v617, %v665
        %667 = vmatmul.bf16.gmra.mxu0 %v407
        %v668 = vpop.f32.mrf.mxu0
        %v669 = vadd.f32 %v620, %v668
        %v670 = vpop.f32.mrf.mxu0
        %v671 = vadd.f32 %v622, %v670
        %672 = vmatmul.bf16.gmra.mxu0 %v409
        %v673 = vpop.f32.mrf.mxu0
        %v674 = vadd.f32 %v625, %v673
        %v675 = vpop.f32.mrf.mxu0
        %v676 = vadd.f32 %v627, %v675
        %677 = vmatmul.bf16.gmra.mxu0 %v411
        %v678 = vpop.f32.mrf.mxu0
        %v679 = vadd.f32 %v630, %v678
        %v680 = vpop.f32.mrf.mxu0
        %v681 = vadd.f32 %v632, %v680
        %682 = vmatmul.bf16.gmra.mxu0 %v413
        %v683 = vpop.f32.mrf.mxu0
        %v684 = vadd.f32 %v635, %v683
        %v685 = vpop.f32.mrf.mxu0
        %v686 = vadd.f32 %v637, %v685
        %687 = vdwg.mxu0
        %688 = vmatpush.bf16.msra.mxu0 %v541
        %689 = vmatpush.bf16.msra.mxu0 %v539
        %690 = vmatpush.bf16.msra.mxu0 %v537
        %691 = vmatpush.bf16.msra.mxu0 %v535
        %692 = vmatpush.bf16.msra.mxu0 %v533
        %693 = vmatpush.bf16.msra.mxu0 %v531
        %694 = vmatpush.bf16.msra.mxu0 %v529
        %695 = vmatpush.bf16.msra.mxu0 %v527
        %696 = vmatmul.bf16.gmra.mxu0 %v398
        %v697 = vpop.f32.mrf.mxu0
        %v698 = vadd.f32 %v347, %v697
        %v699 = vpop.f32.mrf.mxu0
        %v700 = vadd.f32 %v347, %v699
        %701 = vmatmul.bf16.gmra.mxu0 %v400
        %v702 = vpop.f32.mrf.mxu0
        %v703 = vadd.f32 %v347, %v702
        %v704 = vpop.f32.mrf.mxu0
        %v705 = vadd.f32 %v347, %v704
        %706 = vmatmul.bf16.gmra.mxu0 %v402
        %v707 = vpop.f32.mrf.mxu0
        %v708 = vadd.f32 %v347, %v707
        %v709 = vpop.f32.mrf.mxu0
        %v710 = vadd.f32 %v347, %v709
        %711 = vmatmul.bf16.gmra.mxu0 %v404
        %v712 = vpop.f32.mrf.mxu0
        %v713 = vadd.f32 %v347, %v712
        %v714 = vpop.f32.mrf.mxu0
        %v715 = vadd.f32 %v347, %v714
        %716 = vmatmul.bf16.gmra.mxu0 %v406
        %v717 = vpop.f32.mrf.mxu0
        %v718 = vadd.f32 %v347, %v717
        %v719 = vpop.f32.mrf.mxu0
        %v720 = vadd.f32 %v347, %v719
        %721 = vmatmul.bf16.gmra.mxu0 %v408
        %v722 = vpop.f32.mrf.mxu0
        %v723 = vadd.f32 %v347, %v722
        %v724 = vpop.f32.mrf.mxu0
        %v725 = vadd.f32 %v347, %v724
        %726 = vmatmul.bf16.gmra.mxu0 %v410
        %v727 = vpop.f32.mrf.mxu0
        %v728 = vadd.f32 %v347, %v727
        %v729 = vpop.f32.mrf.mxu0
        %v730 = vadd.f32 %v347, %v729
        %731 = vmatmul.bf16.gmra.mxu0 %v412
        %v732 = vpop.f32.mrf.mxu0
        %v733 = vadd.f32 %v347, %v732
        %v734 = vpop.f32.mrf.mxu0
        %v735 = vadd.f32 %v347, %v734
        %736 = vdwg.mxu0
        %737 = vmatpush.bf16.msra.mxu0 %v557
        %738 = vmatpush.bf16.msra.mxu0 %v555
        %739 = vmatpush.bf16.msra.mxu0 %v553
        %740 = vmatpush.bf16.msra.mxu0 %v551
        %741 = vmatpush.bf16.msra.mxu0 %v549
        %742 = vmatpush.bf16.msra.mxu0 %v547
        %743 = vmatpush.bf16.msra.mxu0 %v545
        %744 = vmatpush.bf16.msra.mxu0 %v543
        %745 = vmatmul.bf16.gmra.mxu0 %v399
        %v746 = vpop.f32.mrf.mxu0
        %v747 = vadd.f32 %v698, %v746
        %v748 = vpop.f32.mrf.mxu0
        %v749 = vadd.f32 %v700, %v748
        %750 = vmatmul.bf16.gmra.mxu0 %v401
        %v751 = vpop.f32.mrf.mxu0
        %v752 = vadd.f32 %v703, %v751
        %v753 = vpop.f32.mrf.mxu0
        %v754 = vadd.f32 %v705, %v753
        %755 = vmatmul.bf16.gmra.mxu0 %v403
        %v756 = vpop.f32.mrf.mxu0
        %v757 = vadd.f32 %v708, %v756
        %v758 = vpop.f32.mrf.mxu0
        %v759 = vadd.f32 %v710, %v758
        %760 = vmatmul.bf16.gmra.mxu0 %v405
        %v761 = vpop.f32.mrf.mxu0
        %v762 = vadd.f32 %v713, %v761
        %v763 = vpop.f32.mrf.mxu0
        %v764 = vadd.f32 %v715, %v763
        %765 = vmatmul.bf16.gmra.mxu0 %v407
        %v766 = vpop.f32.mrf.mxu0
        %v767 = vadd.f32 %v718, %v766
        %v768 = vpop.f32.mrf.mxu0
        %v769 = vadd.f32 %v720, %v768
        %770 = vmatmul.bf16.gmra.mxu0 %v409
        %v771 = vpop.f32.mrf.mxu0
        %v772 = vadd.f32 %v723, %v771
        %v773 = vpop.f32.mrf.mxu0
        %v774 = vadd.f32 %v725, %v773
        %775 = vmatmul.bf16.gmra.mxu0 %v411
        %v776 = vpop.f32.mrf.mxu0
        %v777 = vadd.f32 %v728, %v776
        %v778 = vpop.f32.mrf.mxu0
        %v779 = vadd.f32 %v730, %v778
        %780 = vmatmul.bf16.gmra.mxu0 %v413
        %v781 = vpop.f32.mrf.mxu0
        %v782 = vadd.f32 %v733, %v781
        %v783 = vpop.f32.mrf.mxu0
        %v784 = vadd.f32 %v735, %v783
        %785 = vdwg.mxu0
        %v786 = vmul.f32 %v649, 0.2
        %v787 = vmul.f32 %v747, 0.2
        %v788 = vmul.f32 %v651, 0.2
        %v789 = vmul.f32 %v749, 0.2
        %v790 = vmul.f32 %v654, 0.2
        %v791 = vmul.f32 %v752, 0.2
        %v792 = vmul.f32 %v656, 0.2
        %v793 = vmul.f32 %v754, 0.2
        %v794 = vmul.f32 %v659, 0.2
        %v795 = vmul.f32 %v757, 0.2
        %v796 = vmul.f32 %v661, 0.2
        %v797 = vmul.f32 %v759, 0.2
        %v798 = vmul.f32 %v664, 0.2
        %v799 = vmul.f32 %v762, 0.2
        %v800 = vmul.f32 %v666, 0.2
        %v801 = vmul.f32 %v764, 0.2
        %v802 = vmul.f32 %v669, 0.2
        %v803 = vmul.f32 %v767, 0.2
        %v804 = vmul.f32 %v671, 0.2
        %v805 = vmul.f32 %v769, 0.2
        %v806 = vmul.f32 %v674, 0.2
        %v807 = vmul.f32 %v772, 0.2
        %v808 = vmul.f32 %v676, 0.2
        %v809 = vmul.f32 %v774, 0.2
        %v810 = vmul.f32 %v679, 0.2
        %v811 = vmul.f32 %v777, 0.2
        %v812 = vmul.f32 %v681, 0.2
        %v813 = vmul.f32 %v779, 0.2
        %v814 = vmul.f32 %v684, 0.2
        %v815 = vmul.f32 %v782, 0.2
        %v816 = vmul.f32 %v686, 0.2
        %v817 = vmul.f32 %v784, 0.2
        %v818 = vmax.f32 %v649, %v786
        %v819 = vmax.f32 %v747, %v787
        %v820 = vmax.f32 %v651, %v788
        %v821 = vmax.f32 %v749, %v789
        %v822 = vmax.f32 %v654, %v790
        %v823 = vmax.f32 %v752, %v791
        %v824 = vmax.f32 %v656, %v792
        %v825 = vmax.f32 %v754, %v793
        %v826 = vmax.f32 %v659, %v794
        %v827 = vmax.f32 %v757, %v795
        %v828 = vmax.f32 %v661, %v796
        %v829 = vmax.f32 %v759, %v797
        %v830 = vmax.f32 %v664, %v798
        %v831 = vmax.f32 %v762, %v799
        %v832 = vmax.f32 %v666, %v800
        %v833 = vmax.f32 %v764, %v801
        %v834 = vmax.f32 %v669, %v802
        %v835 = vmax.f32 %v767, %v803
        %v836 = vmax.f32 %v671, %v804
        %v837 = vmax.f32 %v769, %v805
        %v838 = vmax.f32 %v674, %v806
        %v839 = vmax.f32 %v772, %v807
        %v840 = vmax.f32 %v676, %v808
        %v841 = vmax.f32 %v774, %v809
        %v842 = vmax.f32 %v679, %v810
        %v843 = vmax.f32 %v777, %v811
        %v844 = vmax.f32 %v681, %v812
        %v845 = vmax.f32 %v779, %v813
        %v846 = vmax.f32 %v684, %v814
        %v847 = vmax.f32 %v782, %v815
        %v848 = vmax.f32 %v686, %v816
        %v849 = vmax.f32 %v784, %v817
        %v850 = vpack.c.bf16 %v820, %v818
        %v851 = vpack.c.bf16 %v821, %v819
        %v852 = vpack.c.bf16 %v824, %v822
        %v853 = vpack.c.bf16 %v825, %v823
        %v854 = vpack.c.bf16 %v828, %v826
        %v855 = vpack.c.bf16 %v829, %v827
        %v856 = vpack.c.bf16 %v832, %v830
        %v857 = vpack.c.bf16 %v833, %v831
        %v858 = vpack.c.bf16 %v836, %v834
        %v859 = vpack.c.bf16 %v837, %v835
        %v860 = vpack.c.bf16 %v840, %v838
        %v861 = vpack.c.bf16 %v841, %v839
        %v862 = vpack.c.bf16 %v844, %v842
        %v863 = vpack.c.bf16 %v845, %v843
        %v864 = vpack.c.bf16 %v848, %v846
        %v865 = vpack.c.bf16 %v849, %v847
        %v866 = vld [vmem:[#allocation8] sm:$0xff]
        %v867 = vld [vmem:[#allocation8 + $0x8] sm:$0xff]
        %v868 = vld [vmem:[#allocation8 + $0x10] sm:$0xff]
        %v869 = vld [vmem:[#allocation8 + $0x18] sm:$0xff]
        %v870 = vld [vmem:[#allocation8 + $0x20] sm:$0xff]
        %v871 = vld [vmem:[#allocation8 + $0x28] sm:$0xff]
        %v872 = vld [vmem:[#allocation8 + $0x30] sm:$0xff]
        %v873 = vld [vmem:[#allocation8 + $0x38] sm:$0xff]
        %v874 = vld [vmem:[#allocation8 + $0x40] sm:$0xff]
        %v875 = vld [vmem:[#allocation8 + $0x48] sm:$0xff]
        %v876 = vld [vmem:[#allocation8 + $0x50] sm:$0xff]
        %v877 = vld [vmem:[#allocation8 + $0x58] sm:$0xff]
        %v878 = vld [vmem:[#allocation8 + $0x60] sm:$0xff]
        %v879 = vld [vmem:[#allocation8 + $0x68] sm:$0xff]
        %v880 = vld [vmem:[#allocation8 + $0x70] sm:$0xff]
        %v881 = vld [vmem:[#allocation8 + $0x78] sm:$0xff]
        %v882 = vld [vmem:[#allocation8 + $0x80] sm:$0xff]
        %v883 = vld [vmem:[#allocation8 + $0x88] sm:$0xff]
        %v884 = vld [vmem:[#allocation8 + $0x90] sm:$0xff]
        %v885 = vld [vmem:[#allocation8 + $0x98] sm:$0xff]
        %v886 = vld [vmem:[#allocation8 + $0xa0] sm:$0xff]
        %v887 = vld [vmem:[#allocation8 + $0xa8] sm:$0xff]
        %v888 = vld [vmem:[#allocation8 + $0xb0] sm:$0xff]
        %v889 = vld [vmem:[#allocation8 + $0xb8] sm:$0xff]
        %v890 = vld [vmem:[#allocation8 + $0xc0] sm:$0xff]
        %v891 = vld [vmem:[#allocation8 + $0xc8] sm:$0xff]
        %v892 = vld [vmem:[#allocation8 + $0xd0] sm:$0xff]
        %v893 = vld [vmem:[#allocation8 + $0xd8] sm:$0xff]
        %v894 = vld [vmem:[#allocation8 + $0xe0] sm:$0xff]
        %v895 = vld [vmem:[#allocation8 + $0xe8] sm:$0xff]
        %v896 = vld [vmem:[#allocation8 + $0xf0] sm:$0xff]
        %v897 = vld [vmem:[#allocation8 + $0xf8] sm:$0xff]
        %v898 = vld [vmem:[%s4] sm:$0x3]
        %v900 = vperm.slane %v898, 0
        %v901 = vperm.slane %v898, 1
        %v936 = vunpack.c.l.b16 %v866
        %v937 = vunpack.c.h.b16 %v866
        %v938 = vunpack.c.l.b16 %v867
        %v939 = vunpack.c.h.b16 %v867
        %v940 = vunpack.c.l.b16 %v868
        %v941 = vunpack.c.h.b16 %v868
        %v942 = vunpack.c.l.b16 %v869
        %v943 = vunpack.c.h.b16 %v869
        %v944 = vunpack.c.l.b16 %v870
        %v945 = vunpack.c.h.b16 %v870
        %v946 = vunpack.c.l.b16 %v871
        %v947 = vunpack.c.h.b16 %v871
        %v948 = vunpack.c.l.b16 %v872
        %v949 = vunpack.c.h.b16 %v872
        %v950 = vunpack.c.l.b16 %v873
        %v951 = vunpack.c.h.b16 %v873
        %v952 = vunpack.c.l.b16 %v874
        %v953 = vunpack.c.h.b16 %v874
        %v954 = vunpack.c.l.b16 %v875
        %v955 = vunpack.c.h.b16 %v875
        %v956 = vunpack.c.l.b16 %v876
        %v957 = vunpack.c.h.b16 %v876
        %v958 = vunpack.c.l.b16 %v877
        %v959 = vunpack.c.h.b16 %v877
        %v960 = vunpack.c.l.b16 %v878
        %v961 = vunpack.c.h.b16 %v878
        %v962 = vunpack.c.l.b16 %v879
        %v963 = vunpack.c.h.b16 %v879
        %v964 = vunpack.c.l.b16 %v880
        %v965 = vunpack.c.h.b16 %v880
        %v966 = vunpack.c.l.b16 %v881
        %v967 = vunpack.c.h.b16 %v881
        %v968 = vunpack.c.l.b16 %v882
        %v969 = vunpack.c.h.b16 %v882
        %v970 = vunpack.c.l.b16 %v883
        %v971 = vunpack.c.h.b16 %v883
        %v972 = vunpack.c.l.b16 %v884
        %v973 = vunpack.c.h.b16 %v884
        %v974 = vunpack.c.l.b16 %v885
        %v975 = vunpack.c.h.b16 %v885
        %v976 = vunpack.c.l.b16 %v886
        %v977 = vunpack.c.h.b16 %v886
        %v978 = vunpack.c.l.b16 %v887
        %v979 = vunpack.c.h.b16 %v887
        %v980 = vunpack.c.l.b16 %v888
        %v981 = vunpack.c.h.b16 %v888
        %v982 = vunpack.c.l.b16 %v889
        %v983 = vunpack.c.h.b16 %v889
        %v984 = vunpack.c.l.b16 %v890
        %v985 = vunpack.c.h.b16 %v890
        %v986 = vunpack.c.l.b16 %v891
        %v987 = vunpack.c.h.b16 %v891
        %v988 = vunpack.c.l.b16 %v892
        %v989 = vunpack.c.h.b16 %v892
        %v990 = vunpack.c.l.b16 %v893
        %v991 = vunpack.c.h.b16 %v893
        %v992 = vunpack.c.l.b16 %v894
        %v993 = vunpack.c.h.b16 %v894
        %v994 = vunpack.c.l.b16 %v895
        %v995 = vunpack.c.h.b16 %v895
        %v996 = vunpack.c.l.b16 %v896
        %v997 = vunpack.c.h.b16 %v896
        %v998 = vunpack.c.l.b16 %v897
        %v999 = vunpack.c.h.b16 %v897
        %v1000 = vpack.c.b16 %v938, %v936
        %v1001 = vpack.c.b16 %v939, %v937
        %v1002 = vpack.c.b16 %v942, %v940
        %v1003 = vpack.c.b16 %v943, %v941
        %v1004 = vpack.c.b16 %v946, %v944
        %v1005 = vpack.c.b16 %v947, %v945
        %v1006 = vpack.c.b16 %v950, %v948
        %v1007 = vpack.c.b16 %v951, %v949
        %v1008 = vpack.c.b16 %v954, %v952
        %v1009 = vpack.c.b16 %v955, %v953
        %v1010 = vpack.c.b16 %v958, %v956
        %v1011 = vpack.c.b16 %v959, %v957
        %v1012 = vpack.c.b16 %v962, %v960
        %v1013 = vpack.c.b16 %v963, %v961
        %v1014 = vpack.c.b16 %v966, %v964
        %v1015 = vpack.c.b16 %v967, %v965
        %v1016 = vpack.c.b16 %v970, %v968
        %v1017 = vpack.c.b16 %v971, %v969
        %v1018 = vpack.c.b16 %v974, %v972
        %v1019 = vpack.c.b16 %v975, %v973
        %v1020 = vpack.c.b16 %v978, %v976
        %v1021 = vpack.c.b16 %v979, %v977
        %v1022 = vpack.c.b16 %v982, %v980
        %v1023 = vpack.c.b16 %v983, %v981
        %v1024 = vpack.c.b16 %v986, %v984
        %v1025 = vpack.c.b16 %v987, %v985
        %v1026 = vpack.c.b16 %v990, %v988
        %v1027 = vpack.c.b16 %v991, %v989
        %v1028 = vpack.c.b16 %v994, %v992
        %v1029 = vpack.c.b16 %v995, %v993
        %v1030 = vpack.c.b16 %v998, %v996
        %v1031 = vpack.c.b16 %v999, %v997
        %1064 = vmatpush.bf16.msra.mxu0 %v1014
        %1065 = vmatpush.bf16.msra.mxu0 %v1012
        %1066 = vmatpush.bf16.msra.mxu0 %v1010
        %1067 = vmatpush.bf16.msra.mxu0 %v1008
        %1068 = vmatpush.bf16.msra.mxu0 %v1006
        %1069 = vmatpush.bf16.msra.mxu0 %v1004
        %1070 = vmatpush.bf16.msra.mxu0 %v1002
        %1071 = vmatpush.bf16.msra.mxu0 %v1000
        %1072 = vmatmul.bf16.gmra.mxu0 %v850
        %v1073 = vpop.f32.mrf.mxu0
        %v1074 = vadd.f32 %v900, %v1073
        %v1075 = vpop.f32.mrf.mxu0
        %v1076 = vadd.f32 %v900, %v1075
        %1077 = vmatmul.bf16.gmra.mxu0 %v852
        %v1078 = vpop.f32.mrf.mxu0
        %v1079 = vadd.f32 %v900, %v1078
        %v1080 = vpop.f32.mrf.mxu0
        %v1081 = vadd.f32 %v900, %v1080
        %1082 = vmatmul.bf16.gmra.mxu0 %v854
        %v1083 = vpop.f32.mrf.mxu0
        %v1084 = vadd.f32 %v900, %v1083
        %v1085 = vpop.f32.mrf.mxu0
        %v1086 = vadd.f32 %v900, %v1085
        %1087 = vmatmul.bf16.gmra.mxu0 %v856
        %v1088 = vpop.f32.mrf.mxu0
        %v1089 = vadd.f32 %v900, %v1088
        %v1090 = vpop.f32.mrf.mxu0
        %v1091 = vadd.f32 %v900, %v1090
        %1092 = vmatmul.bf16.gmra.mxu0 %v858
        %v1093 = vpop.f32.mrf.mxu0
        %v1094 = vadd.f32 %v900, %v1093
        %v1095 = vpop.f32.mrf.mxu0
        %v1096 = vadd.f32 %v900, %v1095
        %1097 = vmatmul.bf16.gmra.mxu0 %v860
        %v1098 = vpop.f32.mrf.mxu0
        %v1099 = vadd.f32 %v900, %v1098
        %v1100 = vpop.f32.mrf.mxu0
        %v1101 = vadd.f32 %v900, %v1100
        %1102 = vmatmul.bf16.gmra.mxu0 %v862
        %v1103 = vpop.f32.mrf.mxu0
        %v1104 = vadd.f32 %v900, %v1103
        %v1105 = vpop.f32.mrf.mxu0
        %v1106 = vadd.f32 %v900, %v1105
        %1107 = vmatmul.bf16.gmra.mxu0 %v864
        %v1108 = vpop.f32.mrf.mxu0
        %v1109 = vadd.f32 %v900, %v1108
        %v1110 = vpop.f32.mrf.mxu0
        %v1111 = vadd.f32 %v900, %v1110
        %1112 = vdwg.mxu0
        %1113 = vmatpush.bf16.msra.mxu0 %v1030
        %1114 = vmatpush.bf16.msra.mxu0 %v1028
        %1115 = vmatpush.bf16.msra.mxu0 %v1026
        %1116 = vmatpush.bf16.msra.mxu0 %v1024
        %1117 = vmatpush.bf16.msra.mxu0 %v1022
        %1118 = vmatpush.bf16.msra.mxu0 %v1020
        %1119 = vmatpush.bf16.msra.mxu0 %v1018
        %1120 = vmatpush.bf16.msra.mxu0 %v1016
        %1121 = vmatmul.bf16.gmra.mxu0 %v851
        %v1122 = vpop.f32.mrf.mxu0
        %v1123 = vadd.f32 %v1074, %v1122
        %v1124 = vpop.f32.mrf.mxu0
        %v1125 = vadd.f32 %v1076, %v1124
        %1126 = vmatmul.bf16.gmra.mxu0 %v853
        %v1127 = vpop.f32.mrf.mxu0
        %v1128 = vadd.f32 %v1079, %v1127
        %v1129 = vpop.f32.mrf.mxu0
        %v1130 = vadd.f32 %v1081, %v1129
        %1131 = vmatmul.bf16.gmra.mxu0 %v855
        %v1132 = vpop.f32.mrf.mxu0
        %v1133 = vadd.f32 %v1084, %v1132
        %v1134 = vpop.f32.mrf.mxu0
        %v1135 = vadd.f32 %v1086, %v1134
        %1136 = vmatmul.bf16.gmra.mxu0 %v857
        %v1137 = vpop.f32.mrf.mxu0
        %v1138 = vadd.f32 %v1089, %v1137
        %v1139 = vpop.f32.mrf.mxu0
        %v1140 = vadd.f32 %v1091, %v1139
        %1141 = vmatmul.bf16.gmra.mxu0 %v859
        %v1142 = vpop.f32.mrf.mxu0
        %v1143 = vadd.f32 %v1094, %v1142
        %v1144 = vpop.f32.mrf.mxu0
        %v1145 = vadd.f32 %v1096, %v1144
        %1146 = vmatmul.bf16.gmra.mxu0 %v861
        %v1147 = vpop.f32.mrf.mxu0
        %v1148 = vadd.f32 %v1099, %v1147
        %v1149 = vpop.f32.mrf.mxu0
        %v1150 = vadd.f32 %v1101, %v1149
        %1151 = vmatmul.bf16.gmra.mxu0 %v863
        %v1152 = vpop.f32.mrf.mxu0
        %v1153 = vadd.f32 %v1104, %v1152
        %v1154 = vpop.f32.mrf.mxu0
        %v1155 = vadd.f32 %v1106, %v1154
        %1156 = vmatmul.bf16.gmra.mxu0 %v865
        %v1157 = vpop.f32.mrf.mxu0
        %v1158 = vadd.f32 %v1109, %v1157
        %v1159 = vpop.f32.mrf.mxu0
        %v1160 = vadd.f32 %v1111, %v1159
        %1161 = vdwg.mxu0
        %1162 = vmatpush.bf16.msra.mxu0 %v1015
        %1163 = vmatpush.bf16.msra.mxu0 %v1013
        %1164 = vmatpush.bf16.msra.mxu0 %v1011
        %1165 = vmatpush.bf16.msra.mxu0 %v1009
        %1166 = vmatpush.bf16.msra.mxu0 %v1007
        %1167 = vmatpush.bf16.msra.mxu0 %v1005
        %1168 = vmatpush.bf16.msra.mxu0 %v1003
        %1169 = vmatpush.bf16.msra.mxu0 %v1001
        %1170 = vmatmul.bf16.gmra.mxu0 %v850
        %v1171 = vpop.f32.mrf.mxu0
        %v1172 = vadd.f32 %v901, %v1171
        %v1173 = vpop.f32.mrf.mxu0
        %v1174 = vadd.f32 %v901, %v1173
        %1175 = vmatmul.bf16.gmra.mxu0 %v852
        %v1176 = vpop.f32.mrf.mxu0
        %v1177 = vadd.f32 %v901, %v1176
        %v1178 = vpop.f32.mrf.mxu0
        %v1179 = vadd.f32 %v901, %v1178
        %1180 = vmatmul.bf16.gmra.mxu0 %v854
        %v1181 = vpop.f32.mrf.mxu0
        %v1182 = vadd.f32 %v901, %v1181
        %v1183 = vpop.f32.mrf.mxu0
        %v1184 = vadd.f32 %v901, %v1183
        %1185 = vmatmul.bf16.gmra.mxu0 %v856
        %v1186 = vpop.f32.mrf.mxu0
        %v1187 = vadd.f32 %v901, %v1186
        %v1188 = vpop.f32.mrf.mxu0
        %v1189 = vadd.f32 %v901, %v1188
        %1190 = vmatmul.bf16.gmra.mxu0 %v858
        %v1191 = vpop.f32.mrf.mxu0
        %v1192 = vadd.f32 %v901, %v1191
        %v1193 = vpop.f32.mrf.mxu0
        %v1194 = vadd.f32 %v901, %v1193
        %1195 = vmatmul.bf16.gmra.mxu0 %v860
        %v1196 = vpop.f32.mrf.mxu0
        %v1197 = vadd.f32 %v901, %v1196
        %v1198 = vpop.f32.mrf.mxu0
        %v1199 = vadd.f32 %v901, %v1198
        %1200 = vmatmul.bf16.gmra.mxu0 %v862
        %v1201 = vpop.f32.mrf.mxu0
        %v1202 = vadd.f32 %v901, %v1201
        %v1203 = vpop.f32.mrf.mxu0
        %v1204 = vadd.f32 %v901, %v1203
        %1205 = vmatmul.bf16.gmra.mxu0 %v864
        %v1206 = vpop.f32.mrf.mxu0
        %v1207 = vadd.f32 %v901, %v1206
        %v1208 = vpop.f32.mrf.mxu0
        %v1209 = vadd.f32 %v901, %v1208
        %1210 = vdwg.mxu0
        %1211 = vmatpush.bf16.msra.mxu0 %v1031
        %1212 = vmatpush.bf16.msra.mxu0 %v1029
        %1213 = vmatpush.bf16.msra.mxu0 %v1027
        %1214 = vmatpush.bf16.msra.mxu0 %v1025
        %1215 = vmatpush.bf16.msra.mxu0 %v1023
        %1216 = vmatpush.bf16.msra.mxu0 %v1021
        %1217 = vmatpush.bf16.msra.mxu0 %v1019
        %1218 = vmatpush.bf16.msra.mxu0 %v1017
        %1219 = vmatmul.bf16.gmra.mxu0 %v851
        %v1220 = vpop.f32.mrf.mxu0
        %v1221 = vadd.f32 %v1172, %v1220
        %v1222 = vpop.f32.mrf.mxu0
        %v1223 = vadd.f32 %v1174, %v1222
        %1224 = vmatmul.bf16.gmra.mxu0 %v853
        %v1225 = vpop.f32.mrf.mxu0
        %v1226 = vadd.f32 %v1177, %v1225
        %v1227 = vpop.f32.mrf.mxu0
        %v1228 = vadd.f32 %v1179, %v1227
        %1229 = vmatmul.bf16.gmra.mxu0 %v855
        %v1230 = vpop.f32.mrf.mxu0
        %v1231 = vadd.f32 %v1182, %v1230
        %v1232 = vpop.f32.mrf.mxu0
        %v1233 = vadd.f32 %v1184, %v1232
        %1234 = vmatmul.bf16.gmra.mxu0 %v857
        %v1235 = vpop.f32.mrf.mxu0
        %v1236 = vadd.f32 %v1187, %v1235
        %v1237 = vpop.f32.mrf.mxu0
        %v1238 = vadd.f32 %v1189, %v1237
        %1239 = vmatmul.bf16.gmra.mxu0 %v859
        %v1240 = vpop.f32.mrf.mxu0
        %v1241 = vadd.f32 %v1192, %v1240
        %v1242 = vpop.f32.mrf.mxu0
        %v1243 = vadd.f32 %v1194, %v1242
        %1244 = vmatmul.bf16.gmra.mxu0 %v861
        %v1245 = vpop.f32.mrf.mxu0
        %v1246 = vadd.f32 %v1197, %v1245
        %v1247 = vpop.f32.mrf.mxu0
        %v1248 = vadd.f32 %v1199, %v1247
        %1249 = vmatmul.bf16.gmra.mxu0 %v863
        %v1250 = vpop.f32.mrf.mxu0
        %v1251 = vadd.f32 %v1202, %v1250
        %v1252 = vpop.f32.mrf.mxu0
        %v1253 = vadd.f32 %v1204, %v1252
        %1254 = vmatmul.bf16.gmra.mxu0 %v865
        %v1255 = vpop.f32.mrf.mxu0
        %v1256 = vadd.f32 %v1207, %v1255
        %v1257 = vpop.f32.mrf.mxu0
        %v1258 = vadd.f32 %v1209, %v1257
        %1259 = vdwg.mxu0
        %1260 = vst [vmem:[%s293] sm:$0xff] %v1123
        %1261 = vst [vmem:[%s293 + $0x8] sm:$0xff] %v1221
        %1262 = vst [vmem:[%s293 + $0x10] sm:$0xff] %v1125
        %1263 = vst [vmem:[%s293 + $0x18] sm:$0xff] %v1223
        %1264 = vst [vmem:[%s293 + $0x20] sm:$0xff] %v1128
        %1265 = vst [vmem:[%s293 + $0x28] sm:$0xff] %v1226
        %1266 = vst [vmem:[%s293 + $0x30] sm:$0xff] %v1130
        %1267 = vst [vmem:[%s293 + $0x38] sm:$0xff] %v1228
        %1268 = vst [vmem:[%s293 + $0x40] sm:$0xff] %v1133
        %1269 = vst [vmem:[%s293 + $0x48] sm:$0xff] %v1231
        %1270 = vst [vmem:[%s293 + $0x50] sm:$0xff] %v1135
        %1271 = vst [vmem:[%s293 + $0x58] sm:$0xff] %v1233
        %1272 = vst [vmem:[%s293 + $0x60] sm:$0xff] %v1138
        %1273 = vst [vmem:[%s293 + $0x68] sm:$0xff] %v1236
        %1274 = vst [vmem:[%s293 + $0x70] sm:$0xff] %v1140
        %1275 = vst [vmem:[%s293 + $0x78] sm:$0xff] %v1238
        %1276 = vst [vmem:[%s293 + $0x80] sm:$0xff] %v1143
        %1277 = vst [vmem:[%s293 + $0x88] sm:$0xff] %v1241
        %1278 = vst [vmem:[%s293 + $0x90] sm:$0xff] %v1145
        %1279 = vst [vmem:[%s293 + $0x98] sm:$0xff] %v1243
        %1280 = vst [vmem:[%s293 + $0xa0] sm:$0xff] %v1148
        %1281 = vst [vmem:[%s293 + $0xa8] sm:$0xff] %v1246
        %1282 = vst [vmem:[%s293 + $0xb0] sm:$0xff] %v1150
        %1283 = vst [vmem:[%s293 + $0xb8] sm:$0xff] %v1248
        %1284 = vst [vmem:[%s293 + $0xc0] sm:$0xff] %v1153
        %1285 = vst [vmem:[%s293 + $0xc8] sm:$0xff] %v1251
        %1286 = vst [vmem:[%s293 + $0xd0] sm:$0xff] %v1155
        %1287 = vst [vmem:[%s293 + $0xd8] sm:$0xff] %v1253
        %1288 = vst [vmem:[%s293 + $0xe0] sm:$0xff] %v1158
        %1289 = vst [vmem:[%s293 + $0xe8] sm:$0xff] %v1256
        %1290 = vst [vmem:[%s293 + $0xf0] sm:$0xff] %v1160
        %1291 = vst [vmem:[%s293 + $0xf8] sm:$0xff] %v1258
        %s1292 = sand.u32 %s142, 1
        %s1293 = scalar_lea.sflag [#allocation4], %s1292
        %s1294 = sand.u32 %s142, 1
        %s1295 = smul.addr %s1294, 256
        %s1296 = scalar_lea.vmem [#allocation10], %s1295
        // Predicated region
        $region57: #{tpu_custom_call.1} parent=39 // pred_check
          %p1297 = pneg %p152
        $region58: #{tpu_custom_call.1} parent=39 // pred_check_branch
          %1299 = sbr.rel (%p1297) target = $region60
        $region59: #{tpu_custom_call.1} parent=39 // pred_region
          %s1300 = smul.u32 16, %s24
          %1302 = vsyncadd %s1293, 0
          %s1303 = smul.addr %s1300, 2
          %s1304 = smul.addr %s1303, 8
          %s1305 = scalar_lea.hbm %s5, %s1304
          %s1306 = sshll.u32 %s1296, 4
          %s1307 = int_to_ptr.vmem [resolvable:$true] %s1306
          %s1308 = sshll.u32 %s1305, 4
          %s1309 = int_to_ptr.hbm [resolvable:$true] %s1308
          %1314 = dma.vmem_to_hbm [thread:$0]  %s1307, 4096, %s1309, %s1293, 256, 256, 16
        $region60: #{tpu_custom_call.1} parent=39 // pred_fallthru
          _
      $region40: #{tpu_custom_call.1} parent=5 // pred_fallthru
        _
      %p1315 = scmp.le.s32.totalorder 2, %s19
      // Predicated region
      $region61: #{tpu_custom_call.1} parent=5 // pred_check
        %p1316 = pneg %p1315
      $region62: #{tpu_custom_call.1} parent=5 // pred_check_branch
        %1318 = sbr.rel (%p1316) target = $region64
      $region63: #{tpu_custom_call.1} parent=5 // pred_region
        %s1319 = ssub.s32 %s19, 2
        // Predicated region
        $region65: #{tpu_custom_call.1} parent=63 // pred_check
          %p1320 = pneg %p158
        $region66: #{tpu_custom_call.1} parent=63 // pred_check_branch
          %1322 = sbr.rel (%p1320) target = $region68
        $region67: #{tpu_custom_call.1} parent=63 // pred_region
          %s1323 = sand.u32 %s143, 1
          %s1324 = scalar_lea.sflag [#allocation4], %s1323
          %s1325 = sand.u32 %s143, 1
          %s1326 = smul.addr %s1325, 256
          %s1327 = scalar_lea.vmem [#allocation10], %s1326
          %1329 = dma.done %s1324, 4096
        $region68: #{tpu_custom_call.1} parent=63 // pred_fallthru
          _
      $region64: #{tpu_custom_call.1} parent=5 // pred_fallthru
        _
    $region6: #{tpu_custom_call.1} parent=1 // loop_footer
      %s23 = sadd.s32 1, %s19
    $region7: #{tpu_custom_call.1} parent=1 // loop_footer_branch
      %18 = sbr.rel target = $region3
    $region8: #{tpu_custom_call.1} parent=1 // loop_exit
      _
    %1330 = vsyncpa [#allocation3], 1
    %s1331 = scalar_lea.sflag [#allocation3], 1
    %1332 = vsyncpa %s1331, 1
    %1333 = vsyncpa [#allocation6], 1
    %1334 = vsyncpa [#allocation9], 1
    %1335 = vsyncpa [#allocation4], 1
    %s1336 = scalar_lea.sflag [#allocation4], 1
    %1337 = vsyncpa %s1336, 1

// kernel: tpu_custom_call.1
$region0: #{tpu_custom_call.1}
  #allocation0 [shape = 'u32[]', space=smem, size = 0x4, offset = 0x4, fixed_abs, tag = 'smem constant byte address 0x4 - core index']
  #allocation1 [shape = 'u32[72,128]{1,0:T(1,128)}', space=vmem, size = 0x9000, scoped, tag = 'internal scratch']
  %s0 = inlined_call_operand.hbm [shape: bf16[256,256], index: 0, kind: input, shape index: {}]
  %s1 = inlined_call_operand.hbm [shape: bf16[256,256], index: 1, kind: input, shape index: {}]
  %s2 = inlined_call_operand.hbm [shape: f32[1,256], index: 2, kind: input, shape index: {}]
  %s3 = inlined_call_operand.hbm [shape: bf16[256,256], index: 3, kind: input, shape index: {}]
  %s4 = inlined_call_operand.vmem [shape: f32[1,256], index: 4, kind: input, shape index: {}]
  %s5 = inlined_call_operand.hbm [shape: f32[256,256], index: 5, kind: output, shape index: {}]
  %s6 = sld [smem:[#allocation0]]
  $region69: #{tpu_custom_call.1} parent=0
    _
  %s8 = ssub.s32 1, %s6
  %s9 = scalar_select 0, %s8, %s6
  $region1: #{tpu_custom_call.1} parent=0
    #allocation2 [shape = 'u8[131072]{0}', space=vmem, size = 0x20000, scoped, tag = 'input window, operand 0']
    #allocation3 [shape = 's32[2]{0}', space=sflag, size = 0x8, scoped, tag = 'scoped memory for tpu_custom_call.1']
    #allocation4 [shape = 's32[2]{0}', space=sflag, size = 0x8, scoped, tag = 'scoped memory for tpu_custom_call.1']
    #allocation5 [shape = 'u8[131072]{0}', space=vmem, size = 0x20000, scoped, tag = 'input window, operand 1, single buffered']
    #allocation6 [shape = 's32[1]{0}', space=sflag, size = 0x4, scoped, tag = 'scoped memory for tpu_custom_call.1']
    #allocation7 [shape = 'u8[1024]{0}', space=vmem, size = 0x400, scoped, tag = 'input window, operand 2, single buffered']
    #allocation8 [shape = 'u8[131072]{0}', space=vmem, size = 0x20000, scoped, tag = 'input window, operand 3, single buffered']
    #allocation9 [shape = 's32[1]{0}', space=sflag, size = 0x4, scoped, tag = 'scoped memory for tpu_custom_call.1']
    #allocation10 [shape = 'u8[262144]{0}', space=vmem, size = 0x40000, scoped, tag = 'output window, operand 0']
    %10 = vsyncpa [#allocation3], 0
    %s11 = scalar_lea.sflag [#allocation3], 1
    %12 = vsyncpa %s11, 0
    %13 = vsyncpa [#allocation6], 0
    %14 = vsyncpa [#allocation9], 0
    %15 = vsyncpa [#allocation4], 0
    %s16 = scalar_lea.sflag [#allocation4], 1
    %17 = vsyncpa %s16, 0
    loop: start=0, step=1, limit=4
    $region2: #{tpu_custom_call.1} parent=1 // loop_pre_header
      _
    $region3: #{tpu_custom_call.1} parent=1 // loop_header
      %s19 = sphi 0, %s23
      %p20 = scmp.ge.s32.totalorder %s19, 4
      %s29 = sphi 0, %s31
      %s32 = sphi 0, %s29
      %s33 = sphi 0, %s32
      %s49 = sphi 0, %s33
      %s53 = sphi 0, %s53
      %s55 = sphi 0, %s53
      %s56 = sphi 0, %s55
      %s70 = sphi 0, %s56
      %s74 = sphi 0, %s74
      %s76 = sphi 0, %s74
      %s77 = sphi 0, %s76
      %s91 = sphi 0, %s77
      %s95 = sphi 0, %s95
      %s97 = sphi 0, %s95
      %s98 = sphi 0, %s97
      %s112 = sphi 0, %s98
      %s116 = sphi 0, %s116
      %s118 = sphi 0, %s116
      %s119 = sphi 0, %s118
      %s133 = sphi 0, %s119
      %s139 = sphi 0, %s141
      %s142 = sphi 0, %s139
      %s143 = sphi 0, %s142
      %s159 = sphi 0, %s143
    $region4: #{tpu_custom_call.1} parent=1 // loop_header_branch
      %22 = sbr.rel (%p20) target = $region8
    $region5: #{tpu_custom_call.1} parent=1 // loop_body
      %s24 = ssub.s32 %s19, 1
      %s25 = ssub.s32 %s19, 2
      %s26 = sadd.s32 %s19, 1
      %s27 = ssub.s32 %s19, %s26
      %p28 = scmp.eq.s32.totalorder %s27, 0
      %s30 = sadd.s32 %s29, 1
      %s31 = scalar_select %p28, %s29, %s30
      %p34 = pneg %p28
      %p35 = scmp.eq.s32.totalorder %s19, 1
      %p36 = por %p34, %p35
      %p37 = scmp.ne.s32.totalorder %s29, %s32
      %p38 = scmp.eq.s32.totalorder %s19, 0
      %p39 = por %p37, %p38
      %p40 = scmp.ne.s32.totalorder %s29, %s32
      %p41 = scmp.eq.s32.totalorder %s24, 1
      %p42 = por %p40, %p41
      %p43 = scmp.ne.s32.totalorder %s32, %s33
      %p44 = scmp.eq.s32.totalorder %s24, 0
      %p45 = por %p43, %p44
      %p46 = scmp.ne.s32.totalorder %s32, %s33
      %p47 = scmp.eq.s32.totalorder %s25, 1
      %p48 = por %p46, %p47
      %p50 = scmp.ne.s32.totalorder %s33, %s49
      %p51 = scmp.eq.s32.totalorder %s25, 0
      %p52 = por %p50, %p51
      %s54 = sadd.s32 %s53, 1
      %p57 = scmp.eq.s32.totalorder %s19, 1
      %p58 = scmp.ne.s32.totalorder %s53, %s55
      %p59 = scmp.eq.s32.totalorder %s19, 0
      %p60 = por %p58, %p59
      %p61 = scmp.ne.s32.totalorder %s53, %s55
      %p62 = scmp.eq.s32.totalorder %s24, 1
      %p63 = por %p61, %p62
      %p64 = scmp.ne.s32.totalorder %s55, %s56
      %p65 = scmp.eq.s32.totalorder %s24, 0
      %p66 = por %p64, %p65
      %p67 = scmp.ne.s32.totalorder %s55, %s56
      %p68 = scmp.eq.s32.totalorder %s25, 1
      %p69 = por %p67, %p68
      %p71 = scmp.ne.s32.totalorder %s56, %s70
      %p72 = scmp.eq.s32.totalorder %s25, 0
      %p73 = por %p71, %p72
      %s75 = sadd.s32 %s74, 1
      %p78 = scmp.eq.s32.totalorder %s19, 1
      %p79 = scmp.ne.s32.totalorder %s74, %s76
      %p80 = scmp.eq.s32.totalorder %s19, 0
      %p81 = por %p79, %p80
      %p82 = scmp.ne.s32.totalorder %s74, %s76
      %p83 = scmp.eq.s32.totalorder %s24, 1
      %p84 = por %p82, %p83
      %p85 = scmp.ne.s32.totalorder %s76, %s77
      %p86 = scmp.eq.s32.totalorder %s24, 0
      %p87 = por %p85, %p86
      %p88 = scmp.ne.s32.totalorder %s76, %s77
      %p89 = scmp.eq.s32.totalorder %s25, 1
      %p90 = por %p88, %p89
      %p92 = scmp.ne.s32.totalorder %s77, %s91
      %p93 = scmp.eq.s32.totalorder %s25, 0
      %p94 = por %p92, %p93
      %s96 = sadd.s32 %s95, 1
      %p99 = scmp.eq.s32.totalorder %s19, 1
      %p100 = scmp.ne.s32.totalorder %s95, %s97
      %p101 = scmp.eq.s32.totalorder %s19, 0
      %p102 = por %p100, %p101
      %p103 = scmp.ne.s32.totalorder %s95, %s97
      %p104 = scmp.eq.s32.totalorder %s24, 1
      %p105 = por %p103, %p104
      %p106 = scmp.ne.s32.totalorder %s97, %s98
      %p107 = scmp.eq.s32.totalorder %s24, 0
      %p108 = por %p106, %p107
      %p109 = scmp.ne.s32.totalorder %s97, %s98
      %p110 = scmp.eq.s32.totalorder %s25, 1
      %p111 = por %p109, %p110
      %p113 = scmp.ne.s32.totalorder %s98, %s112
      %p114 = scmp.eq.s32.totalorder %s25, 0
      %p115 = por %p113, %p114
      %s117 = sadd.s32 %s116, 1
      %p120 = scmp.eq.s32.totalorder %s19, 1
      %p121 = scmp.ne.s32.totalorder %s116, %s118
      %p122 = scmp.eq.s32.totalorder %s19, 0
      %p123 = por %p121, %p122
      %p124 = scmp.ne.s32.totalorder %s116, %s118
      %p125 = scmp.eq.s32.totalorder %s24, 1
      %p126 = por %p124, %p125
      %p127 = scmp.ne.s32.totalorder %s118, %s119
      %p128 = scmp.eq.s32.totalorder %s24, 0
      %p129 = por %p127, %p128
      %p130 = scmp.ne.s32.totalorder %s118, %s119
      %p131 = scmp.eq.s32.totalorder %s25, 1
      %p132 = por %p130, %p131
      %p134 = scmp.ne.s32.totalorder %s119, %s133
      %p135 = scmp.eq.s32.totalorder %s25, 0
      %p136 = por %p134, %p135
      %s137 = ssub.s32 %s19, %s26
      %p138 = scmp.eq.s32.totalorder %s137, 0
      %s140 = sadd.s32 %s139, 1
      %s141 = scalar_select %p138, %s139, %s140
      %p144 = pneg %p138
      %p145 = scmp.eq.s32.totalorder %s19, 1
      %p146 = por %p144, %p145
      %p147 = scmp.ne.s32.totalorder %s139, %s142
      %p148 = scmp.eq.s32.totalorder %s19, 0
      %p149 = por %p147, %p148
      %p150 = scmp.ne.s32.totalorder %s139, %s142
      %p151 = scmp.eq.s32.totalorder %s24, 1
      %p152 = por %p150, %p151
      %p153 = scmp.ne.s32.totalorder %s142, %s143
      %p154 = scmp.eq.s32.totalorder %s24, 0
      %p155 = por %p153, %p154
      %p156 = scmp.ne.s32.totalorder %s142, %s143
      %p157 = scmp.eq.s32.totalorder %s25, 1
      %p158 = por %p156, %p157
      %p160 = scmp.ne.s32.totalorder %s143, %s159
      %p161 = scmp.eq.s32.totalorder %s25, 0
      %p162 = por %p160, %p161
      %p163 = scmp.le.s32.totalorder 1, %s19
      %p164 = scmp.lt.s32.totalorder %s19, 3
      %p165 = pnand %p163, %p164
      %p166 = pneg %p165
      // Predicated region
      $region9: #{tpu_custom_call.1} parent=5 // pred_check
        _
      $region10: #{tpu_custom_call.1} parent=5 // pred_check_branch
        %168 = sbr.rel (%p165) target = $region12
      $region11: #{tpu_custom_call.1} parent=5 // pred_region
        %s169 = ssub.s32 %s19, 1
        // Predicated region
        $region13: #{tpu_custom_call.1} parent=11 // pred_check
          %p170 = pneg %p66
        $region14: #{tpu_custom_call.1} parent=11 // pred_check_branch
          %172 = sbr.rel (%p170) target = $region16
        $region15: #{tpu_custom_call.1} parent=11 // pred_region
          %174 = vsyncadd [#allocation6], 0
          %s175 = sshll.u32 %s1, 4
          %s176 = int_to_ptr.hbm [resolvable:$true] %s175
          %s177 = sshll.u32 [#allocation5], 4
          %s178 = int_to_ptr.vmem [resolvable:$true] %s177
          %183 = dma.hbm_to_vmem [thread:$0]  %s176, 4096, %s178, [#allocation6], 128, 128, 8
        $region16: #{tpu_custom_call.1} parent=11 // pred_fallthru
          _
        // Predicated region
        $region17: #{tpu_custom_call.1} parent=11 // pred_check
          %p184 = pneg %p87
        $region18: #{tpu_custom_call.1} parent=11 // pred_check_branch
          %186 = sbr.rel (%p184) target = $region20
        $region19: #{tpu_custom_call.1} parent=11 // pred_region
          %188 = vsyncadd [#allocation6], 0
          %s190 = sshll.u32 %s2, 4
          %s191 = int_to_ptr.hbm [resolvable:$true] %s190
          %s192 = sshll.u32 [#allocation7], 4
          %s193 = int_to_ptr.vmem [resolvable:$true] %s192
          %195 = dma.hbm_to_vmem [thread:$0]  %s191, 32, %s193, [#allocation6]
        $region20: #{tpu_custom_call.1} parent=11 // pred_fallthru
          _
        // Predicated region
        $region21: #{tpu_custom_call.1} parent=11 // pred_check
          %p196 = pneg %p108
        $region22: #{tpu_custom_call.1} parent=11 // pred_check_branch
          %198 = sbr.rel (%p196) target = $region24
        $region23: #{tpu_custom_call.1} parent=11 // pred_region
          %200 = vsyncadd [#allocation9], 0
          %s201 = sshll.u32 %s3, 4
          %s202 = int_to_ptr.hbm [resolvable:$true] %s201
          %s203 = sshll.u32 [#allocation8], 4
          %s204 = int_to_ptr.vmem [resolvable:$true] %s203
          %209 = dma.hbm_to_vmem [thread:$0]  %s202, 4096, %s204, [#allocation9], 128, 128, 8
        $region24: #{tpu_custom_call.1} parent=11 // pred_fallthru
          _
        // Predicated region
        $region25: #{tpu_custom_call.1} parent=11 // pred_check
          %p210 = pneg %p129
        $region26: #{tpu_custom_call.1} parent=11 // pred_check_branch
          %212 = sbr.rel (%p210) target = $region28
        $region27: #{tpu_custom_call.1} parent=11 // pred_region
          _
        $region28: #{tpu_custom_call.1} parent=11 // pred_fallthru
          _
      $region12: #{tpu_custom_call.1} parent=5 // pred_fallthru
        _
      %p213 = scmp.lt.s32.totalorder %s19, 2
      // Predicated region
      $region29: #{tpu_custom_call.1} parent=5 // pred_check
        %p214 = pneg %p213
      $region30: #{tpu_custom_call.1} parent=5 // pred_check_branch
        %216 = sbr.rel (%p214) target = $region32
      $region31: #{tpu_custom_call.1} parent=5 // pred_region
        // Predicated region
        $region33: #{tpu_custom_call.1} parent=31 // pred_check
          %p217 = pneg %p39
        $region34: #{tpu_custom_call.1} parent=31 // pred_check_branch
          %219 = sbr.rel (%p217) target = $region36
        $region35: #{tpu_custom_call.1} parent=31 // pred_region
          %s220 = sand.u32 %s29, 1
          %s221 = scalar_lea.sflag [#allocation3], %s220
          %s222 = sand.u32 %s29, 1
          %s223 = smul.addr %s222, 128
          %s224 = scalar_lea.vmem [#allocation2], %s223
          %s225 = smul.u32 16, %s19
          %227 = vsyncadd %s221, 0
          %s228 = smul.addr %s225, 2
          %s229 = smul.addr %s228, 4
          %s230 = scalar_lea.hbm %s0, %s229
          %s231 = sshll.u32 %s230, 4
          %s232 = int_to_ptr.hbm [resolvable:$true] %s231
          %s233 = sshll.u32 %s224, 4
          %s234 = int_to_ptr.vmem [resolvable:$true] %s233
          %239 = dma.hbm_to_vmem [thread:$0]  %s232, 2048, %s234, %s221, 128, 128, 8
        $region36: #{tpu_custom_call.1} parent=31 // pred_fallthru
          _
      $region32: #{tpu_custom_call.1} parent=5 // pred_fallthru
        _
      %p240 = scmp.le.s32.totalorder 1, %s19
      %p241 = scmp.lt.s32.totalorder %s19, 3
      %p242 = pnand %p240, %p241
      %p243 = pneg %p242
      // Predicated region
      $region37: #{tpu_custom_call.1} parent=5 // pred_check
        _
      $region38: #{tpu_custom_call.1} parent=5 // pred_check_branch
        %245 = sbr.rel (%p242) target = $region40
      $region39: #{tpu_custom_call.1} parent=5 // pred_region
        %s246 = ssub.s32 %s19, 1
        %s247 = sand.u32 %s32, 1
        %s248 = scalar_lea.sflag [#allocation3], %s247
        %s249 = sand.u32 %s32, 1
        %s250 = smul.addr %s249, 128
        %s251 = scalar_lea.vmem [#allocation2], %s250
        // Predicated region
        $region41: #{tpu_custom_call.1} parent=39 // pred_check
          %p252 = pneg %p45
        $region42: #{tpu_custom_call.1} parent=39 // pred_check_branch
          %254 = sbr.rel (%p252) target = $region44
        $region43: #{tpu_custom_call.1} parent=39 // pred_region
          %256 = dma.done %s248, 2048
        $region44: #{tpu_custom_call.1} parent=39 // pred_fallthru
          _
        // Predicated region
        $region45: #{tpu_custom_call.1} parent=39 // pred_check
          %p257 = pneg %p66
        $region46: #{tpu_custom_call.1} parent=39 // pred_check_branch
          %259 = sbr.rel (%p257) target = $region48
        $region47: #{tpu_custom_call.1} parent=39 // pred_region
          %261 = dma.done [#allocation6], 4096
        $region48: #{tpu_custom_call.1} parent=39 // pred_fallthru
          _
        // Predicated region
        $region49: #{tpu_custom_call.1} parent=39 // pred_check
          %p262 = pneg %p87
        $region50: #{tpu_custom_call.1} parent=39 // pred_check_branch
          %264 = sbr.rel (%p262) target = $region52
        $region51: #{tpu_custom_call.1} parent=39 // pred_region
          %266 = dma.done [#allocation6], 32
        $region52: #{tpu_custom_call.1} parent=39 // pred_fallthru
          _
        // Predicated region
        $region53: #{tpu_custom_call.1} parent=39 // pred_check
          %p267 = pneg %p108
        $region54: #{tpu_custom_call.1} parent=39 // pred_check_branch
          %269 = sbr.rel (%p267) target = $region56
        $region55: #{tpu_custom_call.1} parent=39 // pred_region
          %271 = dma.done [#allocation9], 4096
        $region56: #{tpu_custom_call.1} parent=39 // pred_fallthru
          _
        %s272 = sand.u32 %s32, 1
        %s273 = scalar_lea.sflag [#allocation3], %s272
        %s274 = sand.u32 %s32, 1
        %s275 = smul.addr %s274, 128
        %s276 = scalar_lea.vmem [#allocation2], %s275
        %p277 = pneg %p45
        %p278 = pneg %p42
        %p279 = pneg %p66
        %p280 = pneg %p63
        %p281 = pneg %p87
        %p282 = pneg %p84
        %p283 = pneg %p108
        %p284 = pneg %p105
        %p285 = pneg %p129
        %p286 = pneg %p126
        %p287 = pneg %p155
        %p288 = pneg %p152
        %s289 = sand.u32 %s142, 1
        %s290 = scalar_lea.sflag [#allocation4], %s289
        %s291 = sand.u32 %s142, 1
        %s292 = smul.addr %s291, 256
        %s293 = scalar_lea.vmem [#allocation10], %s292
        %s294 = smul.u32 16, %s24
        %s295 = smul.u32 16, %s24
        %v296 = vld [vmem:[%s251] sm:$0xff]
        %v297 = vld [vmem:[%s251 + $0x8] sm:$0xff]
        %v298 = vld [vmem:[%s251 + $0x10] sm:$0xff]
        %v299 = vld [vmem:[%s251 + $0x18] sm:$0xff]
        %v300 = vld [vmem:[%s251 + $0x20] sm:$0xff]
        %v301 = vld [vmem:[%s251 + $0x28] sm:$0xff]
        %v302 = vld [vmem:[%s251 + $0x30] sm:$0xff]
        %v303 = vld [vmem:[%s251 + $0x38] sm:$0xff]
        %v304 = vld [vmem:[%s251 + $0x40] sm:$0xff]
        %v305 = vld [vmem:[%s251 + $0x48] sm:$0xff]
        %v306 = vld [vmem:[%s251 + $0x50] sm:$0xff]
        %v307 = vld [vmem:[%s251 + $0x58] sm:$0xff]
        %v308 = vld [vmem:[%s251 + $0x60] sm:$0xff]
        %v309 = vld [vmem:[%s251 + $0x68] sm:$0xff]
        %v310 = vld [vmem:[%s251 + $0x70] sm:$0xff]
        %v311 = vld [vmem:[%s251 + $0x78] sm:$0xff]
        %v312 = vld [vmem:[#allocation5] sm:$0xff]
        %v313 = vld [vmem:[#allocation5 + $0x8] sm:$0xff]
        %v314 = vld [vmem:[#allocation5 + $0x10] sm:$0xff]
        %v315 = vld [vmem:[#allocation5 + $0x18] sm:$0xff]
        %v316 = vld [vmem:[#allocation5 + $0x20] sm:$0xff]
        %v317 = vld [vmem:[#allocation5 + $0x28] sm:$0xff]
        %v318 = vld [vmem:[#allocation5 + $0x30] sm:$0xff]
        %v319 = vld [vmem:[#allocation5 + $0x38] sm:$0xff]
        %v320 = vld [vmem:[#allocation5 + $0x40] sm:$0xff]
        %v321 = vld [vmem:[#allocation5 + $0x48] sm:$0xff]
        %v322 = vld [vmem:[#allocation5 + $0x50] sm:$0xff]
        %v323 = vld [vmem:[#allocation5 + $0x58] sm:$0xff]
        %v324 = vld [vmem:[#allocation5 + $0x60] sm:$0xff]
        %v325 = vld [vmem:[#allocation5 + $0x68] sm:$0xff]
        %v326 = vld [vmem:[#allocation5 + $0x70] sm:$0xff]
        %v327 = vld [vmem:[#allocation5 + $0x78] sm:$0xff]
        %v328 = vld [vmem:[#allocation5 + $0x80] sm:$0xff]
        %v329 = vld [vmem:[#allocation5 + $0x88] sm:$0xff]
        %v330 = vld [vmem:[#allocation5 + $0x90] sm:$0xff]
        %v331 = vld [vmem:[#allocation5 + $0x98] sm:$0xff]
        %v332 = vld [vmem:[#allocation5 + $0xa0] sm:$0xff]
        %v333 = vld [vmem:[#allocation5 + $0xa8] sm:$0xff]
        %v334 = vld [vmem:[#allocation5 + $0xb0] sm:$0xff]
        %v335 = vld [vmem:[#allocation5 + $0xb8] sm:$0xff]
        %v336 = vld [vmem:[#allocation5 + $0xc0] sm:$0xff]
        %v337 = vld [vmem:[#allocation5 + $0xc8] sm:$0xff]
        %v338 = vld [vmem:[#allocation5 + $0xd0] sm:$0xff]
        %v339 = vld [vmem:[#allocation5 + $0xd8] sm:$0xff]
        %v340 = vld [vmem:[#allocation5 + $0xe0] sm:$0xff]
        %v341 = vld [vmem:[#allocation5 + $0xe8] sm:$0xff]
        %v342 = vld [vmem:[#allocation5 + $0xf0] sm:$0xff]
        %v343 = vld [vmem:[#allocation5 + $0xf8] sm:$0xff]
        %v344 = vld [vmem:[#allocation7] sm:$0x3]
        %v346 = vperm.slane %v344, 0
        %v347 = vperm.slane %v344, 1
        %v366 = vunpack.c.l.b16 %v296
        %v367 = vunpack.c.h.b16 %v296
        %v368 = vunpack.c.l.b16 %v297
        %v369 = vunpack.c.h.b16 %v297
        %v370 = vunpack.c.l.b16 %v298
        %v371 = vunpack.c.h.b16 %v298
        %v372 = vunpack.c.l.b16 %v299
        %v373 = vunpack.c.h.b16 %v299
        %v374 = vunpack.c.l.b16 %v300
        %v375 = vunpack.c.h.b16 %v300
        %v376 = vunpack.c.l.b16 %v301
        %v377 = vunpack.c.h.b16 %v301
        %v378 = vunpack.c.l.b16 %v302
        %v379 = vunpack.c.h.b16 %v302
        %v380 = vunpack.c.l.b16 %v303
        %v381 = vunpack.c.h.b16 %v303
        %v382 = vunpack.c.l.b16 %v304
        %v383 = vunpack.c.h.b16 %v304
        %v384 = vunpack.c.l.b16 %v305
        %v385 = vunpack.c.h.b16 %v305
        %v386 = vunpack.c.l.b16 %v306
        %v387 = vunpack.c.h.b16 %v306
        %v388 = vunpack.c.l.b16 %v307
        %v389 = vunpack.c.h.b16 %v307
        %v390 = vunpack.c.l.b16 %v308
        %v391 = vunpack.c.h.b16 %v308
        %v392 = vunpack.c.l.b16 %v309
        %v393 = vunpack.c.h.b16 %v309
        %v394 = vunpack.c.l.b16 %v310
        %v395 = vunpack.c.h.b16 %v310
        %v396 = vunpack.c.l.b16 %v311
        %v397 = vunpack.c.h.b16 %v311
        %v398 = vpack.c.b16 %v368, %v366
        %v399 = vpack.c.b16 %v369, %v367
        %v400 = vpack.c.b16 %v372, %v370
        %v401 = vpack.c.b16 %v373, %v371
        %v402 = vpack.c.b16 %v376, %v374
        %v403 = vpack.c.b16 %v377, %v375
        %v404 = vpack.c.b16 %v380, %v378
        %v405 = vpack.c.b16 %v381, %v379
        %v406 = vpack.c.b16 %v384, %v382
        %v407 = vpack.c.b16 %v385, %v383
        %v408 = vpack.c.b16 %v388, %v386
        %v409 = vpack.c.b16 %v389, %v387
        %v410 = vpack.c.b16 %v392, %v390
        %v411 = vpack.c.b16 %v393, %v391
        %v412 = vpack.c.b16 %v396, %v394
        %v413 = vpack.c.b16 %v397, %v395
        %v462 = vunpack.c.l.b16 %v312
        %v463 = vunpack.c.h.b16 %v312
        %v464 = vunpack.c.l.b16 %v313
        %v465 = vunpack.c.h.b16 %v313
        %v466 = vunpack.c.l.b16 %v314
        %v467 = vunpack.c.h.b16 %v314
        %v468 = vunpack.c.l.b16 %v315
        %v469 = vunpack.c.h.b16 %v315
        %v470 = vunpack.c.l.b16 %v316
        %v471 = vunpack.c.h.b16 %v316
        %v472 = vunpack.c.l.b16 %v317
        %v473 = vunpack.c.h.b16 %v317
        %v474 = vunpack.c.l.b16 %v318
        %v475 = vunpack.c.h.b16 %v318
        %v476 = vunpack.c.l.b16 %v319
        %v477 = vunpack.c.h.b16 %v319
        %v478 = vunpack.c.l.b16 %v320
        %v479 = vunpack.c.h.b16 %v320
        %v480 = vunpack.c.l.b16 %v321
        %v481 = vunpack.c.h.b16 %v321
        %v482 = vunpack.c.l.b16 %v322
        %v483 = vunpack.c.h.b16 %v322
        %v484 = vunpack.c.l.b16 %v323
        %v485 = vunpack.c.h.b16 %v323
        %v486 = vunpack.c.l.b16 %v324
        %v487 = vunpack.c.h.b16 %v324
        %v488 = vunpack.c.l.b16 %v325
        %v489 = vunpack.c.h.b16 %v325
        %v490 = vunpack.c.l.b16 %v326
        %v491 = vunpack.c.h.b16 %v326
        %v492 = vunpack.c.l.b16 %v327
        %v493 = vunpack.c.h.b16 %v327
        %v494 = vunpack.c.l.b16 %v328
        %v495 = vunpack.c.h.b16 %v328
        %v496 = vunpack.c.l.b16 %v329
        %v497 = vunpack.c.h.b16 %v329
        %v498 = vunpack.c.l.b16 %v330
        %v499 = vunpack.c.h.b16 %v330
        %v500 = vunpack.c.l.b16 %v331
        %v501 = vunpack.c.h.b16 %v331
        %v502 = vunpack.c.l.b16 %v332
        %v503 = vunpack.c.h.b16 %v332
        %v504 = vunpack.c.l.b16 %v333
        %v505 = vunpack.c.h.b16 %v333
        %v506 = vunpack.c.l.b16 %v334
        %v507 = vunpack.c.h.b16 %v334
        %v508 = vunpack.c.l.b16 %v335
        %v509 = vunpack.c.h.b16 %v335
        %v510 = vunpack.c.l.b16 %v336
        %v511 = vunpack.c.h.b16 %v336
        %v512 = vunpack.c.l.b16 %v337
        %v513 = vunpack.c.h.b16 %v337
        %v514 = vunpack.c.l.b16 %v338
        %v515 = vunpack.c.h.b16 %v338
        %v516 = vunpack.c.l.b16 %v339
        %v517 = vunpack.c.h.b16 %v339
        %v518 = vunpack.c.l.b16 %v340
        %v519 = vunpack.c.h.b16 %v340
        %v520 = vunpack.c.l.b16 %v341
        %v521 = vunpack.c.h.b16 %v341
        %v522 = vunpack.c.l.b16 %v342
        %v523 = vunpack.c.h.b16 %v342
        %v524 = vunpack.c.l.b16 %v343
        %v525 = vunpack.c.h.b16 %v343
        %v526 = vpack.c.b16 %v464, %v462
        %v527 = vpack.c.b16 %v465, %v463
        %v528 = vpack.c.b16 %v468, %v466
        %v529 = vpack.c.b16 %v469, %v467
        %v530 = vpack.c.b16 %v472, %v470
        %v531 = vpack.c.b16 %v473, %v471
        %v532 = vpack.c.b16 %v476, %v474
        %v533 = vpack.c.b16 %v477, %v475
        %v534 = vpack.c.b16 %v480, %v478
        %v535 = vpack.c.b16 %v481, %v479
        %v536 = vpack.c.b16 %v484, %v482
        %v537 = vpack.c.b16 %v485, %v483
        %v538 = vpack.c.b16 %v488, %v486
        %v539 = vpack.c.b16 %v489, %v487
        %v540 = vpack.c.b16 %v492, %v490
        %v541 = vpack.c.b16 %v493, %v491
        %v542 = vpack.c.b16 %v496, %v494
        %v543 = vpack.c.b16 %v497, %v495
        %v544 = vpack.c.b16 %v500, %v498
        %v545 = vpack.c.b16 %v501, %v499
        %v546 = vpack.c.b16 %v504, %v502
        %v547 = vpack.c.b16 %v505, %v503
        %v548 = vpack.c.b16 %v508, %v506
        %v549 = vpack.c.b16 %v509, %v507
        %v550 = vpack.c.b16 %v512, %v510
        %v551 = vpack.c.b16 %v513, %v511
        %v552 = vpack.c.b16 %v516, %v514
        %v553 = vpack.c.b16 %v517, %v515
        %v554 = vpack.c.b16 %v520, %v518
        %v555 = vpack.c.b16 %v521, %v519
        %v556 = vpack.c.b16 %v524, %v522
        %v557 = vpack.c.b16 %v525, %v523
        %590 = vmatpush.bf16.msra.mxu0 %v540
        %591 = vmatpush.bf16.msra.mxu0 %v538
        %592 = vmatpush.bf16.msra.mxu0 %v536
        %593 = vmatpush.bf16.msra.mxu0 %v534
        %594 = vmatpush.bf16.msra.mxu0 %v532
        %595 = vmatpush.bf16.msra.mxu0 %v530
        %596 = vmatpush.bf16.msra.mxu0 %v528
        %597 = vmatpush.bf16.msra.mxu0 %v526
        %598 = vmatmul.bf16.gmra.mxu0 %v398
        %v599 = vpop.f32.mrf.mxu0
        %v600 = vadd.f32 %v346, %v599
        %v601 = vpop.f32.mrf.mxu0
        %v602 = vadd.f32 %v346, %v601
        %603 = vmatmul.bf16.gmra.mxu0 %v400
        %v604 = vpop.f32.mrf.mxu0
        %v605 = vadd.f32 %v346, %v604
        %v606 = vpop.f32.mrf.mxu0
        %v607 = vadd.f32 %v346, %v606
        %608 = vmatmul.bf16.gmra.mxu0 %v402
        %v609 = vpop.f32.mrf.mxu0
        %v610 = vadd.f32 %v346, %v609
        %v611 = vpop.f32.mrf.mxu0
        %v612 = vadd.f32 %v346, %v611
        %613 = vmatmul.bf16.gmra.mxu0 %v404
        %v614 = vpop.f32.mrf.mxu0
        %v615 = vadd.f32 %v346, %v614
        %v616 = vpop.f32.mrf.mxu0
        %v617 = vadd.f32 %v346, %v616
        %618 = vmatmul.bf16.gmra.mxu0 %v406
        %v619 = vpop.f32.mrf.mxu0
        %v620 = vadd.f32 %v346, %v619
        %v621 = vpop.f32.mrf.mxu0
        %v622 = vadd.f32 %v346, %v621
        %623 = vmatmul.bf16.gmra.mxu0 %v408
        %v624 = vpop.f32.mrf.mxu0
        %v625 = vadd.f32 %v346, %v624
        %v626 = vpop.f32.mrf.mxu0
        %v627 = vadd.f32 %v346, %v626
        %628 = vmatmul.bf16.gmra.mxu0 %v410
        %v629 = vpop.f32.mrf.mxu0
        %v630 = vadd.f32 %v346, %v629
        %v631 = vpop.f32.mrf.mxu0
        %v632 = vadd.f32 %v346, %v631
        %633 = vmatmul.bf16.gmra.mxu0 %v412
        %v634 = vpop.f32.mrf.mxu0
        %v635 = vadd.f32 %v346, %v634
        %v636 = vpop.f32.mrf.mxu0
        %v637 = vadd.f32 %v346, %v636
        %638 = vdwg.mxu0
        %639 = vmatpush.bf16.msra.mxu0 %v556
        %640 = vmatpush.bf16.msra.mxu0 %v554
        %641 = vmatpush.bf16.msra.mxu0 %v552
        %642 = vmatpush.bf16.msra.mxu0 %v550
        %643 = vmatpush.bf16.msra.mxu0 %v548
        %644 = vmatpush.bf16.msra.mxu0 %v546
        %645 = vmatpush.bf16.msra.mxu0 %v544
        %646 = vmatpush.bf16.msra.mxu0 %v542
        %647 = vmatmul.bf16.gmra.mxu0 %v399
        %v648 = vpop.f32.mrf.mxu0
        %v649 = vadd.f32 %v600, %v648
        %v650 = vpop.f32.mrf.mxu0
        %v651 = vadd.f32 %v602, %v650
        %652 = vmatmul.bf16.gmra.mxu0 %v401
        %v653 = vpop.f32.mrf.mxu0
        %v654 = vadd.f32 %v605, %v653
        %v655 = vpop.f32.mrf.mxu0
        %v656 = vadd.f32 %v607, %v655
        %657 = vmatmul.bf16.gmra.mxu0 %v403
        %v658 = vpop.f32.mrf.mxu0
        %v659 = vadd.f32 %v610, %v658
        %v660 = vpop.f32.mrf.mxu0
        %v661 = vadd.f32 %v612, %v660
        %662 = vmatmul.bf16.gmra.mxu0 %v405
        %v663 = vpop.f32.mrf.mxu0
        %v664 = vadd.f32 %v615, %v663
        %v665 = vpop.f32.mrf.mxu0
        %v666 = vadd.f32 %v617, %v665
        %667 = vmatmul.bf16.gmra.mxu0 %v407
        %v668 = vpop.f32.mrf.mxu0
        %v669 = vadd.f32 %v620, %v668
        %v670 = vpop.f32.mrf.mxu0
        %v671 = vadd.f32 %v622, %v670
        %672 = vmatmul.bf16.gmra.mxu0 %v409
        %v673 = vpop.f32.mrf.mxu0
        %v674 = vadd.f32 %v625, %v673
        %v675 = vpop.f32.mrf.mxu0
        %v676 = vadd.f32 %v627, %v675
        %677 = vmatmul.bf16.gmra.mxu0 %v411
        %v678 = vpop.f32.mrf.mxu0
        %v679 = vadd.f32 %v630, %v678
        %v680 = vpop.f32.mrf.mxu0
        %v681 = vadd.f32 %v632, %v680
        %682 = vmatmul.bf16.gmra.mxu0 %v413
        %v683 = vpop.f32.mrf.mxu0
        %v684 = vadd.f32 %v635, %v683
        %v685 = vpop.f32.mrf.mxu0
        %v686 = vadd.f32 %v637, %v685
        %687 = vdwg.mxu0
        %688 = vmatpush.bf16.msra.mxu0 %v541
        %689 = vmatpush.bf16.msra.mxu0 %v539
        %690 = vmatpush.bf16.msra.mxu0 %v537
        %691 = vmatpush.bf16.msra.mxu0 %v535
        %692 = vmatpush.bf16.msra.mxu0 %v533
        %693 = vmatpush.bf16.msra.mxu0 %v531
        %694 = vmatpush.bf16.msra.mxu0 %v529
        %695 = vmatpush.bf16.msra.mxu0 %v527
        %696 = vmatmul.bf16.gmra.mxu0 %v398
        %v697 = vpop.f32.mrf.mxu0
        %v698 = vadd.f32 %v347, %v697
        %v699 = vpop.f32.mrf.mxu0
        %v700 = vadd.f32 %v347, %v699
        %701 = vmatmul.bf16.gmra.mxu0 %v400
        %v702 = vpop.f32.mrf.mxu0
        %v703 = vadd.f32 %v347, %v702
        %v704 = vpop.f32.mrf.mxu0
        %v705 = vadd.f32 %v347, %v704
        %706 = vmatmul.bf16.gmra.mxu0 %v402
        %v707 = vpop.f32.mrf.mxu0
        %v708 = vadd.f32 %v347, %v707
        %v709 = vpop.f32.mrf.mxu0
        %v710 = vadd.f32 %v347, %v709
        %711 = vmatmul.bf16.gmra.mxu0 %v404
        %v712 = vpop.f32.mrf.mxu0
        %v713 = vadd.f32 %v347, %v712
        %v714 = vpop.f32.mrf.mxu0
        %v715 = vadd.f32 %v347, %v714
        %716 = vmatmul.bf16.gmra.mxu0 %v406
        %v717 = vpop.f32.mrf.mxu0
        %v718 = vadd.f32 %v347, %v717
        %v719 = vpop.f32.mrf.mxu0
        %v720 = vadd.f32 %v347, %v719
        %721 = vmatmul.bf16.gmra.mxu0 %v408
        %v722 = vpop.f32.mrf.mxu0
        %v723 = vadd.f32 %v347, %v722
        %v724 = vpop.f32.mrf.mxu0
        %v725 = vadd.f32 %v347, %v724
        %726 = vmatmul.bf16.gmra.mxu0 %v410
        %v727 = vpop.f32.mrf.mxu0
        %v728 = vadd.f32 %v347, %v727
        %v729 = vpop.f32.mrf.mxu0
        %v730 = vadd.f32 %v347, %v729
        %731 = vmatmul.bf16.gmra.mxu0 %v412
        %v732 = vpop.f32.mrf.mxu0
        %v733 = vadd.f32 %v347, %v732
        %v734 = vpop.f32.mrf.mxu0
        %v735 = vadd.f32 %v347, %v734
        %736 = vdwg.mxu0
        %737 = vmatpush.bf16.msra.mxu0 %v557
        %738 = vmatpush.bf16.msra.mxu0 %v555
        %739 = vmatpush.bf16.msra.mxu0 %v553
        %740 = vmatpush.bf16.msra.mxu0 %v551
        %741 = vmatpush.bf16.msra.mxu0 %v549
        %742 = vmatpush.bf16.msra.mxu0 %v547
        %743 = vmatpush.bf16.msra.mxu0 %v545
        %744 = vmatpush.bf16.msra.mxu0 %v543
        %745 = vmatmul.bf16.gmra.mxu0 %v399
        %v746 = vpop.f32.mrf.mxu0
        %v747 = vadd.f32 %v698, %v746
        %v748 = vpop.f32.mrf.mxu0
        %v749 = vadd.f32 %v700, %v748
        %750 = vmatmul.bf16.gmra.mxu0 %v401
        %v751 = vpop.f32.mrf.mxu0
        %v752 = vadd.f32 %v703, %v751
        %v753 = vpop.f32.mrf.mxu0
        %v754 = vadd.f32 %v705, %v753
        %755 = vmatmul.bf16.gmra.mxu0 %v403
        %v756 = vpop.f32.mrf.mxu0
        %v757 = vadd.f32 %v708, %v756
        %v758 = vpop.f32.mrf.mxu0
        %v759 = vadd.f32 %v710, %v758
        %760 = vmatmul.bf16.gmra.mxu0 %v405
        %v761 = vpop.f32.mrf.mxu0
        %v762 = vadd.f32 %v713, %v761
        %v763 = vpop.f32.mrf.mxu0
        %v764 = vadd.f32 %v715, %v763
        %765 = vmatmul.bf16.gmra.mxu0 %v407
        %v766 = vpop.f32.mrf.mxu0
        %v767 = vadd.f32 %v718, %v766
        %v768 = vpop.f32.mrf.mxu0
        %v769 = vadd.f32 %v720, %v768
        %770 = vmatmul.bf16.gmra.mxu0 %v409
        %v771 = vpop.f32.mrf.mxu0
        %v772 = vadd.f32 %v723, %v771
        %v773 = vpop.f32.mrf.mxu0
        %v774 = vadd.f32 %v725, %v773
        %775 = vmatmul.bf16.gmra.mxu0 %v411
        %v776 = vpop.f32.mrf.mxu0
        %v777 = vadd.f32 %v728, %v776
        %v778 = vpop.f32.mrf.mxu0
        %v779 = vadd.f32 %v730, %v778
        %780 = vmatmul.bf16.gmra.mxu0 %v413
        %v781 = vpop.f32.mrf.mxu0
        %v782 = vadd.f32 %v733, %v781
        %v783 = vpop.f32.mrf.mxu0
        %v784 = vadd.f32 %v735, %v783
        %785 = vdwg.mxu0
        %v786 = vmul.f32 %v649, 0.2
        %v787 = vmul.f32 %v747, 0.2
        %v788 = vmul.f32 %v651, 0.2
        %v789 = vmul.f32 %v749, 0.2
        %v790 = vmul.f32 %v654, 0.2
        %v791 = vmul.f32 %v752, 0.2
        %v792 = vmul.f32 %v656, 0.2
        %v793 = vmul.f32 %v754, 0.2
        %v794 = vmul.f32 %v659, 0.2
        %v795 = vmul.f32 %v757, 0.2
        %v796 = vmul.f32 %v661, 0.2
        %v797 = vmul.f32 %v759, 0.2
        %v798 = vmul.f32 %v664, 0.2
        %v799 = vmul.f32 %v762, 0.2
        %v800 = vmul.f32 %v666, 0.2
        %v801 = vmul.f32 %v764, 0.2
        %v802 = vmul.f32 %v669, 0.2
        %v803 = vmul.f32 %v767, 0.2
        %v804 = vmul.f32 %v671, 0.2
        %v805 = vmul.f32 %v769, 0.2
        %v806 = vmul.f32 %v674, 0.2
        %v807 = vmul.f32 %v772, 0.2
        %v808 = vmul.f32 %v676, 0.2
        %v809 = vmul.f32 %v774, 0.2
        %v810 = vmul.f32 %v679, 0.2
        %v811 = vmul.f32 %v777, 0.2
        %v812 = vmul.f32 %v681, 0.2
        %v813 = vmul.f32 %v779, 0.2
        %v814 = vmul.f32 %v684, 0.2
        %v815 = vmul.f32 %v782, 0.2
        %v816 = vmul.f32 %v686, 0.2
        %v817 = vmul.f32 %v784, 0.2
        %v818 = vmax.f32 %v649, %v786
        %v819 = vmax.f32 %v747, %v787
        %v820 = vmax.f32 %v651, %v788
        %v821 = vmax.f32 %v749, %v789
        %v822 = vmax.f32 %v654, %v790
        %v823 = vmax.f32 %v752, %v791
        %v824 = vmax.f32 %v656, %v792
        %v825 = vmax.f32 %v754, %v793
        %v826 = vmax.f32 %v659, %v794
        %v827 = vmax.f32 %v757, %v795
        %v828 = vmax.f32 %v661, %v796
        %v829 = vmax.f32 %v759, %v797
        %v830 = vmax.f32 %v664, %v798
        %v831 = vmax.f32 %v762, %v799
        %v832 = vmax.f32 %v666, %v800
        %v833 = vmax.f32 %v764, %v801
        %v834 = vmax.f32 %v669, %v802
        %v835 = vmax.f32 %v767, %v803
        %v836 = vmax.f32 %v671, %v804
        %v837 = vmax.f32 %v769, %v805
        %v838 = vmax.f32 %v674, %v806
        %v839 = vmax.f32 %v772, %v807
        %v840 = vmax.f32 %v676, %v808
        %v841 = vmax.f32 %v774, %v809
        %v842 = vmax.f32 %v679, %v810
        %v843 = vmax.f32 %v777, %v811
        %v844 = vmax.f32 %v681, %v812
        %v845 = vmax.f32 %v779, %v813
        %v846 = vmax.f32 %v684, %v814
        %v847 = vmax.f32 %v782, %v815
        %v848 = vmax.f32 %v686, %v816
        %v849 = vmax.f32 %v784, %v817
        %v850 = vpack.c.bf16 %v820, %v818
        %v851 = vpack.c.bf16 %v821, %v819
        %v852 = vpack.c.bf16 %v824, %v822
        %v853 = vpack.c.bf16 %v825, %v823
        %v854 = vpack.c.bf16 %v828, %v826
        %v855 = vpack.c.bf16 %v829, %v827
        %v856 = vpack.c.bf16 %v832, %v830
        %v857 = vpack.c.bf16 %v833, %v831
        %v858 = vpack.c.bf16 %v836, %v834
        %v859 = vpack.c.bf16 %v837, %v835
        %v860 = vpack.c.bf16 %v840, %v838
        %v861 = vpack.c.bf16 %v841, %v839
        %v862 = vpack.c.bf16 %v844, %v842
        %v863 = vpack.c.bf16 %v845, %v843
        %v864 = vpack.c.bf16 %v848, %v846
        %v865 = vpack.c.bf16 %v849, %v847
        %v866 = vld [vmem:[#allocation8] sm:$0xff]
        %v867 = vld [vmem:[#allocation8 + $0x8] sm:$0xff]
        %v868 = vld [vmem:[#allocation8 + $0x10] sm:$0xff]
        %v869 = vld [vmem:[#allocation8 + $0x18] sm:$0xff]
        %v870 = vld [vmem:[#allocation8 + $0x20] sm:$0xff]
        %v871 = vld [vmem:[#allocation8 + $0x28] sm:$0xff]
        %v872 = vld [vmem:[#allocation8 + $0x30] sm:$0xff]
        %v873 = vld [vmem:[#allocation8 + $0x38] sm:$0xff]
        %v874 = vld [vmem:[#allocation8 + $0x40] sm:$0xff]
        %v875 = vld [vmem:[#allocation8 + $0x48] sm:$0xff]
        %v876 = vld [vmem:[#allocation8 + $0x50] sm:$0xff]
        %v877 = vld [vmem:[#allocation8 + $0x58] sm:$0xff]
        %v878 = vld [vmem:[#allocation8 + $0x60] sm:$0xff]
        %v879 = vld [vmem:[#allocation8 + $0x68] sm:$0xff]
        %v880 = vld [vmem:[#allocation8 + $0x70] sm:$0xff]
        %v881 = vld [vmem:[#allocation8 + $0x78] sm:$0xff]
        %v882 = vld [vmem:[#allocation8 + $0x80] sm:$0xff]
        %v883 = vld [vmem:[#allocation8 + $0x88] sm:$0xff]
        %v884 = vld [vmem:[#allocation8 + $0x90] sm:$0xff]
        %v885 = vld [vmem:[#allocation8 + $0x98] sm:$0xff]
        %v886 = vld [vmem:[#allocation8 + $0xa0] sm:$0xff]
        %v887 = vld [vmem:[#allocation8 + $0xa8] sm:$0xff]
        %v888 = vld [vmem:[#allocation8 + $0xb0] sm:$0xff]
        %v889 = vld [vmem:[#allocation8 + $0xb8] sm:$0xff]
        %v890 = vld [vmem:[#allocation8 + $0xc0] sm:$0xff]
        %v891 = vld [vmem:[#allocation8 + $0xc8] sm:$0xff]
        %v892 = vld [vmem:[#allocation8 + $0xd0] sm:$0xff]
        %v893 = vld [vmem:[#allocation8 + $0xd8] sm:$0xff]
        %v894 = vld [vmem:[#allocation8 + $0xe0] sm:$0xff]
        %v895 = vld [vmem:[#allocation8 + $0xe8] sm:$0xff]
        %v896 = vld [vmem:[#allocation8 + $0xf0] sm:$0xff]
        %v897 = vld [vmem:[#allocation8 + $0xf8] sm:$0xff]
        %v898 = vld [vmem:[%s4] sm:$0x3]
        %v900 = vperm.slane %v898, 0
        %v901 = vperm.slane %v898, 1
        %v936 = vunpack.c.l.b16 %v866
        %v937 = vunpack.c.h.b16 %v866
        %v938 = vunpack.c.l.b16 %v867
        %v939 = vunpack.c.h.b16 %v867
        %v940 = vunpack.c.l.b16 %v868
        %v941 = vunpack.c.h.b16 %v868
        %v942 = vunpack.c.l.b16 %v869
        %v943 = vunpack.c.h.b16 %v869
        %v944 = vunpack.c.l.b16 %v870
        %v945 = vunpack.c.h.b16 %v870
        %v946 = vunpack.c.l.b16 %v871
        %v947 = vunpack.c.h.b16 %v871
        %v948 = vunpack.c.l.b16 %v872
        %v949 = vunpack.c.h.b16 %v872
        %v950 = vunpack.c.l.b16 %v873
        %v951 = vunpack.c.h.b16 %v873
        %v952 = vunpack.c.l.b16 %v874
        %v953 = vunpack.c.h.b16 %v874
        %v954 = vunpack.c.l.b16 %v875
        %v955 = vunpack.c.h.b16 %v875
        %v956 = vunpack.c.l.b16 %v876
        %v957 = vunpack.c.h.b16 %v876
        %v958 = vunpack.c.l.b16 %v877
        %v959 = vunpack.c.h.b16 %v877
        %v960 = vunpack.c.l.b16 %v878
        %v961 = vunpack.c.h.b16 %v878
        %v962 = vunpack.c.l.b16 %v879
        %v963 = vunpack.c.h.b16 %v879
        %v964 = vunpack.c.l.b16 %v880
        %v965 = vunpack.c.h.b16 %v880
        %v966 = vunpack.c.l.b16 %v881
        %v967 = vunpack.c.h.b16 %v881
        %v968 = vunpack.c.l.b16 %v882
        %v969 = vunpack.c.h.b16 %v882
        %v970 = vunpack.c.l.b16 %v883
        %v971 = vunpack.c.h.b16 %v883
        %v972 = vunpack.c.l.b16 %v884
        %v973 = vunpack.c.h.b16 %v884
        %v974 = vunpack.c.l.b16 %v885
        %v975 = vunpack.c.h.b16 %v885
        %v976 = vunpack.c.l.b16 %v886
        %v977 = vunpack.c.h.b16 %v886
        %v978 = vunpack.c.l.b16 %v887
        %v979 = vunpack.c.h.b16 %v887
        %v980 = vunpack.c.l.b16 %v888
        %v981 = vunpack.c.h.b16 %v888
        %v982 = vunpack.c.l.b16 %v889
        %v983 = vunpack.c.h.b16 %v889
        %v984 = vunpack.c.l.b16 %v890
        %v985 = vunpack.c.h.b16 %v890
        %v986 = vunpack.c.l.b16 %v891
        %v987 = vunpack.c.h.b16 %v891
        %v988 = vunpack.c.l.b16 %v892
        %v989 = vunpack.c.h.b16 %v892
        %v990 = vunpack.c.l.b16 %v893
        %v991 = vunpack.c.h.b16 %v893
        %v992 = vunpack.c.l.b16 %v894
        %v993 = vunpack.c.h.b16 %v894
        %v994 = vunpack.c.l.b16 %v895
        %v995 = vunpack.c.h.b16 %v895
        %v996 = vunpack.c.l.b16 %v896
        %v997 = vunpack.c.h.b16 %v896
        %v998 = vunpack.c.l.b16 %v897
        %v999 = vunpack.c.h.b16 %v897
        %v1000 = vpack.c.b16 %v938, %v936
        %v1001 = vpack.c.b16 %v939, %v937
        %v1002 = vpack.c.b16 %v942, %v940
        %v1003 = vpack.c.b16 %v943, %v941
        %v1004 = vpack.c.b16 %v946, %v944
        %v1005 = vpack.c.b16 %v947, %v945
        %v1006 = vpack.c.b16 %v950, %v948
        %v1007 = vpack.c.b16 %v951, %v949
        %v1008 = vpack.c.b16 %v954, %v952
        %v1009 = vpack.c.b16 %v955, %v953
        %v1010 = vpack.c.b16 %v958, %v956
        %v1011 = vpack.c.b16 %v959, %v957
        %v1012 = vpack.c.b16 %v962, %v960
        %v1013 = vpack.c.b16 %v963, %v961
        %v1014 = vpack.c.b16 %v966, %v964
        %v1015 = vpack.c.b16 %v967, %v965
        %v1016 = vpack.c.b16 %v970, %v968
        %v1017 = vpack.c.b16 %v971, %v969
        %v1018 = vpack.c.b16 %v974, %v972
        %v1019 = vpack.c.b16 %v975, %v973
        %v1020 = vpack.c.b16 %v978, %v976
        %v1021 = vpack.c.b16 %v979, %v977
        %v1022 = vpack.c.b16 %v982, %v980
        %v1023 = vpack.c.b16 %v983, %v981
        %v1024 = vpack.c.b16 %v986, %v984
        %v1025 = vpack.c.b16 %v987, %v985
        %v1026 = vpack.c.b16 %v990, %v988
        %v1027 = vpack.c.b16 %v991, %v989
        %v1028 = vpack.c.b16 %v994, %v992
        %v1029 = vpack.c.b16 %v995, %v993
        %v1030 = vpack.c.b16 %v998, %v996
        %v1031 = vpack.c.b16 %v999, %v997
        %1064 = vmatpush.bf16.msra.mxu0 %v1014
        %1065 = vmatpush.bf16.msra.mxu0 %v1012
        %1066 = vmatpush.bf16.msra.mxu0 %v1010
        %1067 = vmatpush.bf16.msra.mxu0 %v1008
        %1068 = vmatpush.bf16.msra.mxu0 %v1006
        %1069 = vmatpush.bf16.msra.mxu0 %v1004
        %1070 = vmatpush.bf16.msra.mxu0 %v1002
        %1071 = vmatpush.bf16.msra.mxu0 %v1000
        %1072 = vmatmul.bf16.gmra.mxu0 %v850
        %v1073 = vpop.f32.mrf.mxu0
        %v1074 = vadd.f32 %v900, %v1073
        %v1075 = vpop.f32.mrf.mxu0
        %v1076 = vadd.f32 %v900, %v1075
        %1077 = vmatmul.bf16.gmra.mxu0 %v852
        %v1078 = vpop.f32.mrf.mxu0
        %v1079 = vadd.f32 %v900, %v1078
        %v1080 = vpop.f32.mrf.mxu0
        %v1081 = vadd.f32 %v900, %v1080
        %1082 = vmatmul.bf16.gmra.mxu0 %v854
        %v1083 = vpop.f32.mrf.mxu0
        %v1084 = vadd.f32 %v900, %v1083
        %v1085 = vpop.f32.mrf.mxu0
        %v1086 = vadd.f32 %v900, %v1085
        %1087 = vmatmul.bf16.gmra.mxu0 %v856
        %v1088 = vpop.f32.mrf.mxu0
        %v1089 = vadd.f32 %v900, %v1088
        %v1090 = vpop.f32.mrf.mxu0
        %v1091 = vadd.f32 %v900, %v1090
        %1092 = vmatmul.bf16.gmra.mxu0 %v858
        %v1093 = vpop.f32.mrf.mxu0
        %v1094 = vadd.f32 %v900, %v1093
        %v1095 = vpop.f32.mrf.mxu0
        %v1096 = vadd.f32 %v900, %v1095
        %1097 = vmatmul.bf16.gmra.mxu0 %v860
        %v1098 = vpop.f32.mrf.mxu0
        %v1099 = vadd.f32 %v900, %v1098
        %v1100 = vpop.f32.mrf.mxu0
        %v1101 = vadd.f32 %v900, %v1100
        %1102 = vmatmul.bf16.gmra.mxu0 %v862
        %v1103 = vpop.f32.mrf.mxu0
        %v1104 = vadd.f32 %v900, %v1103
        %v1105 = vpop.f32.mrf.mxu0
        %v1106 = vadd.f32 %v900, %v1105
        %1107 = vmatmul.bf16.gmra.mxu0 %v864
        %v1108 = vpop.f32.mrf.mxu0
        %v1109 = vadd.f32 %v900, %v1108
        %v1110 = vpop.f32.mrf.mxu0
        %v1111 = vadd.f32 %v900, %v1110
        %1112 = vdwg.mxu0
        %1113 = vmatpush.bf16.msra.mxu0 %v1030
        %1114 = vmatpush.bf16.msra.mxu0 %v1028
        %1115 = vmatpush.bf16.msra.mxu0 %v1026
        %1116 = vmatpush.bf16.msra.mxu0 %v1024
        %1117 = vmatpush.bf16.msra.mxu0 %v1022
        %1118 = vmatpush.bf16.msra.mxu0 %v1020
        %1119 = vmatpush.bf16.msra.mxu0 %v1018
        %1120 = vmatpush.bf16.msra.mxu0 %v1016
        %1121 = vmatmul.bf16.gmra.mxu0 %v851
        %v1122 = vpop.f32.mrf.mxu0
        %v1123 = vadd.f32 %v1074, %v1122
        %v1124 = vpop.f32.mrf.mxu0
        %v1125 = vadd.f32 %v1076, %v1124
        %1126 = vmatmul.bf16.gmra.mxu0 %v853
        %v1127 = vpop.f32.mrf.mxu0
        %v1128 = vadd.f32 %v1079, %v1127
        %v1129 = vpop.f32.mrf.mxu0
        %v1130 = vadd.f32 %v1081, %v1129
        %1131 = vmatmul.bf16.gmra.mxu0 %v855
        %v1132 = vpop.f32.mrf.mxu0
        %v1133 = vadd.f32 %v1084, %v1132
        %v1134 = vpop.f32.mrf.mxu0
        %v1135 = vadd.f32 %v1086, %v1134
        %1136 = vmatmul.bf16.gmra.mxu0 %v857
        %v1137 = vpop.f32.mrf.mxu0
        %v1138 = vadd.f32 %v1089, %v1137
        %v1139 = vpop.f32.mrf.mxu0
        %v1140 = vadd.f32 %v1091, %v1139
        %1141 = vmatmul.bf16.gmra.mxu0 %v859
        %v1142 = vpop.f32.mrf.mxu0
        %v1143 = vadd.f32 %v1094, %v1142
        %v1144 = vpop.f32.mrf.mxu0
        %v1145 = vadd.f32 %v1096, %v1144
        %1146 = vmatmul.bf16.gmra.mxu0 %v861
        %v1147 = vpop.f32.mrf.mxu0
        %v1148 = vadd.f32 %v1099, %v1147
        %v1149 = vpop.f32.mrf.mxu0
        %v1150 = vadd.f32 %v1101, %v1149
        %1151 = vmatmul.bf16.gmra.mxu0 %v863
        %v1152 = vpop.f32.mrf.mxu0
        %v1153 = vadd.f32 %v1104, %v1152
        %v1154 = vpop.f32.mrf.mxu0
        %v1155 = vadd.f32 %v1106, %v1154
        %1156 = vmatmul.bf16.gmra.mxu0 %v865
        %v1157 = vpop.f32.mrf.mxu0
        %v1158 = vadd.f32 %v1109, %v1157
        %v1159 = vpop.f32.mrf.mxu0
        %v1160 = vadd.f32 %v1111, %v1159
        %1161 = vdwg.mxu0
        %1162 = vmatpush.bf16.msra.mxu0 %v1015
        %1163 = vmatpush.bf16.msra.mxu0 %v1013
        %1164 = vmatpush.bf16.msra.mxu0 %v1011
        %1165 = vmatpush.bf16.msra.mxu0 %v1009
        %1166 = vmatpush.bf16.msra.mxu0 %v1007
        %1167 = vmatpush.bf16.msra.mxu0 %v1005
        %1168 = vmatpush.bf16.msra.mxu0 %v1003
        %1169 = vmatpush.bf16.msra.mxu0 %v1001
        %1170 = vmatmul.bf16.gmra.mxu0 %v850
        %v1171 = vpop.f32.mrf.mxu0
        %v1172 = vadd.f32 %v901, %v1171
        %v1173 = vpop.f32.mrf.mxu0
        %v1174 = vadd.f32 %v901, %v1173
        %1175 = vmatmul.bf16.gmra.mxu0 %v852
        %v1176 = vpop.f32.mrf.mxu0
        %v1177 = vadd.f32 %v901, %v1176
        %v1178 = vpop.f32.mrf.mxu0
        %v1179 = vadd.f32 %v901, %v1178
        %1180 = vmatmul.bf16.gmra.mxu0 %v854
        %v1181 = vpop.f32.mrf.mxu0
        %v1182 = vadd.f32 %v901, %v1181
        %v1183 = vpop.f32.mrf.mxu0
        %v1184 = vadd.f32 %v901, %v1183
        %1185 = vmatmul.bf16.gmra.mxu0 %v856
        %v1186 = vpop.f32.mrf.mxu0
        %v1187 = vadd.f32 %v901, %v1186
        %v1188 = vpop.f32.mrf.mxu0
        %v1189 = vadd.f32 %v901, %v1188
        %1190 = vmatmul.bf16.gmra.mxu0 %v858
        %v1191 = vpop.f32.mrf.mxu0
        %v1192 = vadd.f32 %v901, %v1191
        %v1193 = vpop.f32.mrf.mxu0
        %v1194 = vadd.f32 %v901, %v1193
        %1195 = vmatmul.bf16.gmra.mxu0 %v860
        %v1196 = vpop.f32.mrf.mxu0
        %v1197 = vadd.f32 %v901, %v1196
        %v1198 = vpop.f32.mrf.mxu0
        %v1199 = vadd.f32 %v901, %v1198
        %1200 = vmatmul.bf16.gmra.mxu0 %v862
        %v1201 = vpop.f32.mrf.mxu0
        %v1202 = vadd.f32 %v901, %v1201
        %v1203 = vpop.f32.mrf.mxu0
        %v1204 = vadd.f32 %v901, %v1203
        %1205 = vmatmul.bf16.gmra.mxu0 %v864
        %v1206 = vpop.f32.mrf.mxu0
        %v1207 = vadd.f32 %v901, %v1206
        %v1208 = vpop.f32.mrf.mxu0
        %v1209 = vadd.f32 %v901, %v1208
        %1210 = vdwg.mxu0
        %1211 = vmatpush.bf16.msra.mxu0 %v1031
        %1212 = vmatpush.bf16.msra.mxu0 %v1029
        %1213 = vmatpush.bf16.msra.mxu0 %v1027
        %1214 = vmatpush.bf16.msra.mxu0 %v1025
        %1215 = vmatpush.bf16.msra.mxu0 %v1023
        %1216 = vmatpush.bf16.msra.mxu0 %v1021
        %1217 = vmatpush.bf16.msra.mxu0 %v1019
        %1218 = vmatpush.bf16.msra.mxu0 %v1017
        %1219 = vmatmul.bf16.gmra.mxu0 %v851
        %v1220 = vpop.f32.mrf.mxu0
        %v1221 = vadd.f32 %v1172, %v1220
        %v1222 = vpop.f32.mrf.mxu0
        %v1223 = vadd.f32 %v1174, %v1222
        %1224 = vmatmul.bf16.gmra.mxu0 %v853
        %v1225 = vpop.f32.mrf.mxu0
        %v1226 = vadd.f32 %v1177, %v1225
        %v1227 = vpop.f32.mrf.mxu0
        %v1228 = vadd.f32 %v1179, %v1227
        %1229 = vmatmul.bf16.gmra.mxu0 %v855
        %v1230 = vpop.f32.mrf.mxu0
        %v1231 = vadd.f32 %v1182, %v1230
        %v1232 = vpop.f32.mrf.mxu0
        %v1233 = vadd.f32 %v1184, %v1232
        %1234 = vmatmul.bf16.gmra.mxu0 %v857
        %v1235 = vpop.f32.mrf.mxu0
        %v1236 = vadd.f32 %v1187, %v1235
        %v1237 = vpop.f32.mrf.mxu0
        %v1238 = vadd.f32 %v1189, %v1237
        %1239 = vmatmul.bf16.gmra.mxu0 %v859
        %v1240 = vpop.f32.mrf.mxu0
        %v1241 = vadd.f32 %v1192, %v1240
        %v1242 = vpop.f32.mrf.mxu0
        %v1243 = vadd.f32 %v1194, %v1242
        %1244 = vmatmul.bf16.gmra.mxu0 %v861
        %v1245 = vpop.f32.mrf.mxu0
        %v1246 = vadd.f32 %v1197, %v1245
        %v1247 = vpop.f32.mrf.mxu0
        %v1248 = vadd.f32 %v1199, %v1247
        %1249 = vmatmul.bf16.gmra.mxu0 %v863
        %v1250 = vpop.f32.mrf.mxu0
        %v1251 = vadd.f32 %v1202, %v1250
        %v1252 = vpop.f32.mrf.mxu0
        %v1253 = vadd.f32 %v1204, %v1252
        %1254 = vmatmul.bf16.gmra.mxu0 %v865
        %v1255 = vpop.f32.mrf.mxu0
        %v1256 = vadd.f32 %v1207, %v1255
        %v1257 = vpop.f32.mrf.mxu0
        %v1258 = vadd.f32 %v1209, %v1257
        %1259 = vdwg.mxu0
        %1260 = vst [vmem:[%s293] sm:$0xff] %v1123
        %1261 = vst [vmem:[%s293 + $0x8] sm:$0xff] %v1221
        %1262 = vst [vmem:[%s293 + $0x10] sm:$0xff] %v1125
        %1263 = vst [vmem:[%s293 + $0x18] sm:$0xff] %v1223
        %1264 = vst [vmem:[%s293 + $0x20] sm:$0xff] %v1128
        %1265 = vst [vmem:[%s293 + $0x28] sm:$0xff] %v1226
        %1266 = vst [vmem:[%s293 + $0x30] sm:$0xff] %v1130
        %1267 = vst [vmem:[%s293 + $0x38] sm:$0xff] %v1228
        %1268 = vst [vmem:[%s293 + $0x40] sm:$0xff] %v1133
        %1269 = vst [vmem:[%s293 + $0x48] sm:$0xff] %v1231
        %1270 = vst [vmem:[%s293 + $0x50] sm:$0xff] %v1135
        %1271 = vst [vmem:[%s293 + $0x58] sm:$0xff] %v1233
        %1272 = vst [vmem:[%s293 + $0x60] sm:$0xff] %v1138
        %1273 = vst [vmem:[%s293 + $0x68] sm:$0xff] %v1236
        %1274 = vst [vmem:[%s293 + $0x70] sm:$0xff] %v1140
        %1275 = vst [vmem:[%s293 + $0x78] sm:$0xff] %v1238
        %1276 = vst [vmem:[%s293 + $0x80] sm:$0xff] %v1143
        %1277 = vst [vmem:[%s293 + $0x88] sm:$0xff] %v1241
        %1278 = vst [vmem:[%s293 + $0x90] sm:$0xff] %v1145
        %1279 = vst [vmem:[%s293 + $0x98] sm:$0xff] %v1243
        %1280 = vst [vmem:[%s293 + $0xa0] sm:$0xff] %v1148
        %1281 = vst [vmem:[%s293 + $0xa8] sm:$0xff] %v1246
        %1282 = vst [vmem:[%s293 + $0xb0] sm:$0xff] %v1150
        %1283 = vst [vmem:[%s293 + $0xb8] sm:$0xff] %v1248
        %1284 = vst [vmem:[%s293 + $0xc0] sm:$0xff] %v1153
        %1285 = vst [vmem:[%s293 + $0xc8] sm:$0xff] %v1251
        %1286 = vst [vmem:[%s293 + $0xd0] sm:$0xff] %v1155
        %1287 = vst [vmem:[%s293 + $0xd8] sm:$0xff] %v1253
        %1288 = vst [vmem:[%s293 + $0xe0] sm:$0xff] %v1158
        %1289 = vst [vmem:[%s293 + $0xe8] sm:$0xff] %v1256
        %1290 = vst [vmem:[%s293 + $0xf0] sm:$0xff] %v1160
        %1291 = vst [vmem:[%s293 + $0xf8] sm:$0xff] %v1258
        %s1292 = sand.u32 %s142, 1
        %s1293 = scalar_lea.sflag [#allocation4], %s1292
        %s1294 = sand.u32 %s142, 1
        %s1295 = smul.addr %s1294, 256
        %s1296 = scalar_lea.vmem [#allocation10], %s1295
        // Predicated region
        $region57: #{tpu_custom_call.1} parent=39 // pred_check
          %p1297 = pneg %p152
        $region58: #{tpu_custom_call.1} parent=39 // pred_check_branch
          %1299 = sbr.rel (%p1297) target = $region60
        $region59: #{tpu_custom_call.1} parent=39 // pred_region
          %s1300 = smul.u32 16, %s24
          %1302 = vsyncadd %s1293, 0
          %s1303 = smul.addr %s1300, 2
          %s1304 = smul.addr %s1303, 8
          %s1305 = scalar_lea.hbm %s5, %s1304
          %s1306 = sshll.u32 %s1296, 4
          %s1307 = int_to_ptr.vmem [resolvable:$true] %s1306
          %s1308 = sshll.u32 %s1305, 4
          %s1309 = int_to_ptr.hbm [resolvable:$true] %s1308
          %1314 = dma.vmem_to_hbm [thread:$0]  %s1307, 4096, %s1309, %s1293, 256, 256, 16
        $region60: #{tpu_custom_call.1} parent=39 // pred_fallthru
          _
      $region40: #{tpu_custom_call.1} parent=5 // pred_fallthru
        _
      %p1315 = scmp.le.s32.totalorder 2, %s19
      // Predicated region
      $region61: #{tpu_custom_call.1} parent=5 // pred_check
        %p1316 = pneg %p1315
      $region62: #{tpu_custom_call.1} parent=5 // pred_check_branch
        %1318 = sbr.rel (%p1316) target = $region64
      $region63: #{tpu_custom_call.1} parent=5 // pred_region
        %s1319 = ssub.s32 %s19, 2
        // Predicated region
        $region65: #{tpu_custom_call.1} parent=63 // pred_check
          %p1320 = pneg %p158
        $region66: #{tpu_custom_call.1} parent=63 // pred_check_branch
          %1322 = sbr.rel (%p1320) target = $region68
        $region67: #{tpu_custom_call.1} parent=63 // pred_region
          %s1323 = sand.u32 %s143, 1
          %s1324 = scalar_lea.sflag [#allocation4], %s1323
          %s1325 = sand.u32 %s143, 1
          %s1326 = smul.addr %s1325, 256
          %s1327 = scalar_lea.vmem [#allocation10], %s1326
          %1329 = dma.done %s1324, 4096
        $region68: #{tpu_custom_call.1} parent=63 // pred_fallthru
          _
      $region64: #{tpu_custom_call.1} parent=5 // pred_fallthru
        _
    $region6: #{tpu_custom_call.1} parent=1 // loop_footer
      %s23 = sadd.s32 1, %s19
    $region7: #{tpu_custom_call.1} parent=1 // loop_footer_branch
      %18 = sbr.rel target = $region3
    $region8: #{tpu_custom_call.1} parent=1 // loop_exit
      _
    %1330 = vsyncpa [#allocation3], 1
    %s1331 = scalar_lea.sflag [#allocation3], 1
    %1332 = vsyncpa %s1331, 1
    %1333 = vsyncpa [#allocation6], 1
    %1334 = vsyncpa [#allocation9], 1
    %1335 = vsyncpa [#allocation4], 1
    %s1336 = scalar_lea.sflag [#allocation4], 1
    %1337 = vsyncpa %s1336, 1

</llo_original>
